<compile_context>
chip_gen: v6e
topology: v6e:2x2x1
jax: 0.10.0
libtpu: 0.0.40
codegen_flags: <defaults>
</compile_context>

<pallas_src>
import functools

import numpy as np
import jax
import jax.numpy as jnp
from jax import lax
from jax.experimental import pallas as pl
from jax.experimental.pallas import tpu as pltpu

C1, C2, C4, K4 = 16, 32, 64, 3  # MTEX channel widths / conv_4 kernel size


def _round_up(x, m):
    return -(-x // m) * m


def _vmem_capacity_bytes():
    try:
        return int(pltpu.get_tpu_info().vmem_capacity_bytes)
    except Exception:
        return 64 << 20  # conservative fallback (v7x per-core VMEM)


# --------------------------------------------------------------------------- #
# Pallas kernel
# --------------------------------------------------------------------------- #
def _mtex_kernel(x_ref,      # (F, Nb, T)       rows ordered (f, n)
                 w1_ref,     # (T, H1*C1)       conv_1 unfolded
                 b1_ref,     # (1, H1*C1)       f32
                 w2_ref,     # (H1*C1, H2*C2)   conv_2 unfolded (taps fused)
                 b2_ref,     # (1, H2*C2)       f32
                 w3_ref,     # (H2*C2, H2)      1x1 conv as matmul
                 b3_ref,     # (1, 1)           f32
                 m4_ref,     # (F*H2, Ct)       conv_4 column tile
                 b4_ref,     # (1, Ct)          f32
                 fc1w_ref,   # (Ct, 32)         fc1 weight row tile
                 fc1b_ref,   # (1, 32)          f32
                 fc2w_ref,   # (32, NC)
                 fc2b_ref,   # (1, NC)          f32
                 out_ref,    # (Nb, NC)
                 a3_ref,     # scratch (Nb, F*H2)  conv_3 output, view-flat
                 h_ref,      # scratch (Nb, 32)    fc1 accumulator (f32)
                 *, Nb, Ns, F, T, H2, cdt):
    j = pl.program_id(1)

    # ---- conv_1 .. conv_3 once per batch tile (j == 0); cached in scratch --
    @pl.when(j == 0)
    def _():
        def conv_stack(x2d):      # x2d: (F*Ns, T), rows ordered (f, n)
            a1 = jnp.dot(x2d, w1_ref[...], preferred_element_type=jnp.float32)
            a1 = jnp.maximum(a1 + b1_ref[...], 0.0).astype(cdt)
            a2 = jnp.dot(a1, w2_ref[...], preferred_element_type=jnp.float32)
            a2 = jnp.maximum(a2 + b2_ref[...], 0.0).astype(cdt)
            a3 = jnp.dot(a2, w3_ref[...], preferred_element_type=jnp.float32)
            a3 = jnp.maximum(a3 + b3_ref[...], 0.0)            # (F*Ns, H2) f32
            # lane-dense relayout (f, n, h) -> (n, f*H2 + h): a single concat
            # along the lane axis + ONE full-width store (no F narrow vst.msk)
            pieces = [a3[f * Ns:(f + 1) * Ns, :] for f in range(F)]
            return jnp.concatenate(pieces, axis=-1).astype(cdt)  # (Ns, F*H2)

        if Ns == Nb:
            a3_ref[...] = conv_stack(x_ref[...].reshape(F * Nb, T))
        else:
            # bound the conv_1..3 slab temporaries at large F*Nb
            n_sub = Nb // Ns

            def body(s, carry):
                start = pl.multiple_of(s * Ns, Ns)
                xs = x_ref[:, pl.ds(start, Ns), :].reshape(F * Ns, T)
                a3_ref[pl.ds(start, Ns), :] = conv_stack(xs)
                return carry

            lax.fori_loop(0, n_sub, body, 0, unroll=n_sub <= 8)

        # fc1 accumulator initialised with the fc1 bias (saves a later add)
        h_ref[...] = jnp.broadcast_to(fc1b_ref[...], h_ref.shape)

    # ---- conv_4 (+ ReLU) and the fc1 partial product for this column tile --
    a4 = jnp.dot(a3_ref[...], m4_ref[...], preferred_element_type=jnp.float32)
    a4 = jnp.maximum(a4 + b4_ref[...], 0.0).astype(cdt)        # (Nb, Ct)
    h_ref[...] += jnp.dot(a4, fc1w_ref[...],
                          preferred_element_type=jnp.float32)

    # ---- fc2 + write-out on the last column tile ---------------------------
    @pl.when(j == pl.num_programs(1) - 1)
    def _():
        out = jnp.dot(h_ref[...].astype(cdt), fc2w_ref[...],
                      preferred_element_type=jnp.float32)
        out_ref[...] = (out + fc2b_ref[...]).astype(out_ref.dtype)


# --------------------------------------------------------------------------- #
# One-time host-side weight preparation (pure rearrangement, exact).
# --------------------------------------------------------------------------- #
def prepare_mtex(params, T, F, compute_dtype=jnp.float32, block_n_hint=128):
    K1, K2 = T // 2 + 1, T // 4 + 1
    H1 = T - K1 + 1
    H2 = H1 - K2 + 1
    L = H2 - K4 + 1
    assert L >= 1, "time_length too small for conv_4"
    D = C4 * L
    n_classes = int(params["fc2_w"].shape[0])

    f32 = lambda a: np.asarray(a, np.float32)
    w1, b1 = f32(params["w1"]), f32(params["b1"])
    w2, b2 = f32(params["w2"]), f32(params["b2"])
    w3, b3 = f32(params["w3"]), f32(params["b3"])
    w4, b4 = f32(params["w4"]), f32(params["b4"])
    fc1_w, fc1_b = f32(params["fc1_w"]), f32(params["fc1_b"])
    fc2_w, fc2_b = f32(params["fc2_w"]), f32(params["fc2_b"])

    # conv_1 -> dense (T, H1*C1); bias is added in-kernel (cheap VPU add that
    # hides under the MXU) instead of the previous host-side ones column.
    w1d = np.zeros((T, H1 * C1), np.float32)
    k1_taps = w1[:, 0, :, 0].T                                  # (K1, C1)
    for h1 in range(H1):
        w1d[h1:h1 + K1, h1 * C1:(h1 + 1) * C1] = k1_taps
    b1_row = np.tile(b1, H1)[None, :]

    # conv_2 -> dense (H1*C1, H2*C2): all K2 taps and C1 channels fused.
    w2d = np.zeros((H1 * C1, H2 * C2), np.float32)
    for h2 in range(H2):
        for k in range(K2):
            w2d[(h2 + k) * C1:(h2 + k + 1) * C1,
                h2 * C2:(h2 + 1) * C2] = w2[:, :, k, 0].T
    b2_row = np.tile(b2, H2)[None, :]

    # conv_3 (1x1, C2 -> 1) -> block-diagonal (H2*C2, H2).
    w3d = np.zeros((H2 * C2, H2), np.float32)
    for h2 in range(H2):
        w3d[h2 * C2:(h2 + 1) * C2, h2] = w3[0, :, 0, 0]
    b3_s = b3.reshape(1, 1)

    # raw View + conv_4 -> dense (F*H2, C4*L) acting on the per-sample flat
    # a3[n, f*H2 + h]; columns are indexed c*L + l (PyTorch flatten order).
    m4 = np.zeros((F * H2, D), np.float32)
    cols_c = np.arange(C4) * L
    for k in range(K4):
        for l in range(L):
            jpos = np.arange(F) * H2 + (l + k)     # positions in the raw view
            rows = (jpos % F) * H2 + (jpos // F)   # -> our f-major flat index
            m4[rows[:, None], (cols_c + l)[None, :]] += w4[:, :, k].T
    b4_row = np.repeat(b4, L)[None, :]

    fc1_wt = fc1_w.T.copy()                                     # (D, 32)
    fc1_b_row = fc1_b[None, :]
    fc2_wt = fc2_w.T.copy()                                     # (32, NC)
    fc2_b_row = fc2_b[None, :]

    # ---- generation-aware conv_4 / fc1 column tile (Ct) --------------------
    eb = np.dtype(compute_dtype).itemsize
    cap = _vmem_capacity_bytes()
    budget = int(0.6 * cap)
    h1c1, h2c2 = H1 * C1, H2 * C2
    rows_est = min(F * block_n_hint, 2048)
    fixed = 2 * eb * (T * h1c1 + h1c1 * h2c2 + h2c2 * H2 + 32 * n_classes)
    fixed += 2 * 4 * (h1c1 + h2c2 + 1 + 32 + n_classes)         # bias rows
    fixed += 2 * eb * F * block_n_hint * T                       # x batch tile
    fixed += 2 * 4 * block_n_hint * n_classes                    # out tile
    fixed += eb * block_n_hint * F * H2 + 4 * block_n_hint * 32  # scratch
    fixed += 3 * 4 * rows_est * max(h1c1, h2c2)                  # conv1-3 tmps
    per_col = 2 * eb * (F * H2 + 32) + 2 * 4 + 3 * 4 * block_n_hint
    D128 = _round_up(D, 128)
    ct_cols = max(128, ((budget - fixed) // max(per_col, 1)) // 128 * 128)
    Ct = int(min(D128, ct_cols))
    if Ct < D128 and Ct >= 256:
        Ct = (Ct // 256) * 256         # MXU-friendly N dimension on v6e/v7x
    Dpad = _round_up(D, Ct)
    if Dpad != D:
        m4 = np.pad(m4, ((0, 0), (0, Dpad - D)))
        b4_row = np.pad(b4_row, ((0, 0), (0, Dpad - D)))
        fc1_wt = np.pad(fc1_wt, ((0, Dpad - D), (0, 0)))

    cdt = compute_dtype
    arrays = dict(
        w1d=jnp.asarray(w1d, cdt), b1=jnp.asarray(b1_row),
        w2d=jnp.asarray(w2d, cdt), b2=jnp.asarray(b2_row),
        w3d=jnp.asarray(w3d, cdt), b3=jnp.asarray(b3_s),
        m4=jnp.asarray(m4, cdt), b4=jnp.asarray(b4_row),
        fc1_wt=jnp.asarray(fc1_wt, cdt), fc1_b=jnp.asarray(fc1_b_row),
        fc2_wt=jnp.asarray(fc2_wt, cdt), fc2_b=jnp.asarray(fc2_b_row),
    )
    meta = dict(T=T, F=F, H1=H1, H2=H2, L=L, D=D, Dpad=Dpad, Ct=Ct,
                n_classes=n_classes, compute_dtype=cdt, vmem_cap=cap,
                block_n_hint=block_n_hint)
    return dict(arrays=arrays, meta=meta)


# --------------------------------------------------------------------------- #
# Wrapper around pallas_call.
# --------------------------------------------------------------------------- #
def mtex_pallas(x_nchw, prep, block_n=None):
    meta = prep["meta"]
    T, F, H1, H2 = meta["T"], meta["F"], meta["H1"], meta["H2"]
    Dpad, Ct, NC = meta["Dpad"], meta["Ct"], meta["n_classes"]
    cdt = meta["compute_dtype"]
    cap = meta["vmem_cap"]

    N, cin, Tx, Fx = x_nchw.shape
    assert cin == 1 and Tx == T and Fx == F

    eb = np.dtype(cdt).itemsize
    sub = 16 if eb == 2 else 8                  # bf16 packs 2 rows / sublane
    if block_n is None:
        block_n = meta.get("block_n_hint", 128)
    block_n = max(sub, (block_n // sub) * sub)
    Nb = min(block_n, _round_up(N, sub))        # fill the MXU M dimension
    half = _round_up(-(-N // 2), sub)           # >=2 tiles for v7x's 2 TCs
    if _round_up(N, Nb) // Nb < 2 and 32 <= half < Nb:
        Nb = half
    Npad = _round_up(N, Nb)

    # conv_1..3 batch sub-tile: keep the (F*Ns, H1*C1)/(F*Ns, H2*C2) slab
    # temporaries to a few MiB so conv_2 stays MXU-bound, not spill-bound.
    rows_cap = max(sub, (4 << 20) // (4 * (H1 * C1 + H2 * C2 + H2)))
    divisors = [d for d in range(sub, Nb + 1, sub) if Nb % d == 0]
    fitting = [d for d in divisors if F * d <= rows_cap]
    Ns = max(fitting) if fitting else min(divisors)

    # glue: NCHW -> (F, N, T) in the compute dtype, padded to whole tiles.
    x_fnt = jnp.transpose(x_nchw[:, 0, :, :].astype(cdt), (2, 0, 1))
    if Npad != N:
        x_fnt = jnp.pad(x_fnt, ((0, 0), (0, Npad - N), (0, 0)))

    w = prep["arrays"]
    inputs = [x_fnt, w["w1d"], w["b1"], w["w2d"], w["b2"], w["w3d"], w["b3"],
              w["m4"], w["b4"], w["fc1_wt"], w["fc1_b"], w["fc2_wt"],
              w["fc2_b"]]

    grid = (Npad // Nb, Dpad // Ct)
    full = lambda a: pl.BlockSpec(a.shape, lambda i, j, nd=a.ndim: (0,) * nd)
    in_specs = [
        pl.BlockSpec((F, Nb, T), lambda i, j: (0, i, 0)),       # x batch tile
        full(w["w1d"]), full(w["b1"]), full(w["w2d"]), full(w["b2"]),
        full(w["w3d"]), full(w["b3"]),
        pl.BlockSpec((F * H2, Ct), lambda i, j: (0, j)),        # M4 col tile
        pl.BlockSpec((1, Ct), lambda i, j: (0, j)),             # b4 col tile
        pl.BlockSpec((Ct, 32), lambda i, j: (j, 0)),            # fc1 row tile
        full(w["fc1_b"]), full(w["fc2_wt"]), full(w["fc2_b"]),
    ]
    out_spec = pl.BlockSpec((Nb, NC), lambda i, j: (i, 0))

    # explicit VMEM budget: default scoped limit (16/32 MiB) is far below
    # what the larger Nb / Ct tiles need on big problems.
    dbl = lambda a: 2 * a.size * a.dtype.itemsize
    vmem_need = (dbl(w["w1d"]) + dbl(w["b1"]) + dbl(w["w2d"]) + dbl(w["b2"])
                 + dbl(w["w3d"]) + dbl(w["b3"]) + dbl(w["fc1_b"])
                 + dbl(w["fc2_wt"]) + dbl(w["fc2_b"])
                 + 2 * eb * F * Nb * T                       # x tile
                 + 2 * eb * F * H2 * Ct + 2 * 4 * Ct         # m4 / b4 tiles
                 + 2 * eb * Ct * 32                          # fc1 tile
                 + 2 * 4 * Nb * NC                           # out tile
                 + eb * Nb * F * H2 + 4 * Nb * 32            # scratch
                 + 3 * 4 * F * Ns * max(H1 * C1, H2 * C2)    # conv1-3 temps
                 + 3 * 4 * Nb * Ct)                          # conv4/fc1 temps
    vmem_limit = int(min(int(0.9 * cap),
                         max(int(1.5 * vmem_need) + (2 << 20), 32 << 20)))

    kernel = functools.partial(_mtex_kernel, Nb=Nb, Ns=Ns, F=F, T=T, H2=H2,
                               cdt=cdt)
    out = pl.pallas_call(
        kernel,
        out_shape=jax.ShapeDtypeStruct((Npad, NC), jnp.float32),
        grid_spec=pltpu.PrefetchScalarGridSpec(
            num_scalar_prefetch=0,
            grid=grid,
            in_specs=in_specs,
            out_specs=out_spec,
            scratch_shapes=[pltpu.VMEM((Nb, F * H2), cdt),
                            pltpu.VMEM((Nb, 32), jnp.float32)]),
        compiler_params=pltpu.CompilerParams(
            dimension_semantics=("parallel", "arbitrary"),
            vmem_limit_bytes=vmem_limit),
    )(*inputs)
    return out[:N]


# --------------------------------------------------------------------------- #
# Deterministic parameters matching the PyTorch module's shapes.
# --------------------------------------------------------------------------- #
def init_params(key, T, F, n_classes):
    K1, K2 = T // 2 + 1, T // 4 + 1
    H1 = T - K1 + 1
    H2 = H1 - K2 + 1
    L = H2 - K4 + 1
    D1 = C4 * int(np.round(T / 4) - 2 + 1 * (T % 4 != 0) - 1 * (T % 4 == 2))
    assert D1 == C4 * L, "fc1 input size formula mismatch"
    ks = jax.random.split(key, 12)
    rnd = lambda k, s, sc: sc * jax.random.normal(k, s, dtype=jnp.float32)
    return dict(
        w1=rnd(ks[0], (C1, 1, K1, 1), 0.3),   b1=rnd(ks[1], (C1,), 0.1),
        w2=rnd(ks[2], (C2, C1, K2, 1), 0.15), b2=rnd(ks[3], (C2,), 0.1),
        w3=rnd(ks[4], (1, C2, 1, 1), 0.2),    b3=rnd(ks[5], (1,), 0.1),
        w4=rnd(ks[6], (C4, F, K4), 0.2),      b4=rnd(ks[7], (C4,), 0.1),
        fc1_w=rnd(ks[8], (32, D1), 0.1),      fc1_b=rnd(ks[9], (32,), 0.1),
        fc2_w=rnd(ks[10], (n_classes, 32), 0.2),
        fc2_b=rnd(ks[11], (n_classes,), 0.1),
    )


# --------------------------------------------------------------------------- #
# Pure-JAX reference (mirrors the PyTorch forward) for a sanity check.
# --------------------------------------------------------------------------- #
def mtex_reference(x_nchw, p):
    relu = lambda z: jnp.maximum(z, 0.0)
    dn2 = ("NCHW", "OIHW", "NCHW")
    a = lax.conv_general_dilated(x_nchw, p["w1"], (1, 1), "VALID",
                                 dimension_numbers=dn2)
    a = relu(a + p["b1"].reshape(1, -1, 1, 1))
    a = lax.conv_general_dilated(a, p["w2"], (1, 1), "VALID",
                                 dimension_numbers=dn2)
    a = relu(a + p["b2"].reshape(1, -1, 1, 1))
    a = lax.conv_general_dilated(a, p["w3"], (1, 1), "VALID",
                                 dimension_numbers=dn2)
    a = relu(a + p["b3"].reshape(1, -1, 1, 1))
    N, F = x_nchw.shape[0], x_nchw.shape[3]
    v = a.reshape(N, F, -1)                        # raw View(feature_length)
    L = v.shape[2] - K4 + 1
    patches = jnp.stack([v[:, :, k:k + L] for k in range(K4)], axis=-1)
    a4 = jnp.einsum("nflk,cfk->ncl", patches, p["w4"])
    a4 = relu(a4 + p["b4"].reshape(1, -1, 1))
    flat = a4.reshape(N, -1)
    h = flat @ p["fc1_w"].T + p["fc1_b"]
    return h @ p["fc2_w"].T + p["fc2_b"]


if __name__ == "__main__":
    N, T, F, NC = 16, 16, 8, 3
    key = jax.random.PRNGKey(0)
    kx, kp = jax.random.split(key)
    x = jax.random.normal(kx, (N, 1, T, F), dtype=jnp.float32)
    params = init_params(kp, T, F, NC)

    ref = np.asarray(mtex_reference(x, params))

    # f32 path: exact check against the reference.
    prep = prepare_mtex(params, T, F)              # one-time weight prep
    out = jax.block_until_ready(mtex_pallas(x, prep))
    assert out.shape == (N, NC)
    if not np.allclose(np.asarray(out), ref, rtol=5e-2, atol=5e-3):
        raise AssertionError(
            f"Pallas output does not match reference:\n{np.asarray(out)}\nvs\n{ref}")

    # bf16-operand path (f32 accumulation) — exercises the reduced-precision
    # MXU configuration recommended for v6e/v7x.
    prep_bf16 = prepare_mtex(params, T, F, compute_dtype=jnp.bfloat16)
    out_bf = jax.block_until_ready(mtex_pallas(x, prep_bf16))
    assert out_bf.shape == (N, NC)
    assert np.all(np.isfinite(np.asarray(out_bf, dtype=np.float32)))

    print("KERNEL_OK")
</pallas_src>

<mosaic_0001>
module attributes {stable_mosaic.version = 11 : i64} {
  func.func @_mtex_kernel(%arg0: i32, %arg1: i32, %arg2: memref<8x16x16xf32, #tpu.memory_space<vmem>>, %arg3: memref<16x128xf32, #tpu.memory_space<vmem>>, %arg4: memref<1x128xf32, #tpu.memory_space<vmem>>, %arg5: memref<128x128xf32, #tpu.memory_space<vmem>>, %arg6: memref<1x128xf32, #tpu.memory_space<vmem>>, %arg7: memref<128x4xf32, #tpu.memory_space<vmem>>, %arg8: memref<1x1xf32, #tpu.memory_space<vmem>>, %arg9: memref<32x128xf32, #tpu.memory_space<vmem>>, %arg10: memref<1x128xf32, #tpu.memory_space<vmem>>, %arg11: memref<128x32xf32, #tpu.memory_space<vmem>>, %arg12: memref<1x32xf32, #tpu.memory_space<vmem>>, %arg13: memref<32x3xf32, #tpu.memory_space<vmem>>, %arg14: memref<1x3xf32, #tpu.memory_space<vmem>>, %arg15: memref<16x3xf32, #tpu.memory_space<vmem>>, %arg16: memref<16x32xf32, #tpu.memory_space<vmem>>, %arg17: memref<16x32xf32, #tpu.memory_space<vmem>>) attributes {dimension_semantics = [#tpu.dimension_semantics<parallel>, #tpu.dimension_semantics<arbitrary>], iteration_bounds = array<i64: 1, 1>, scalar_prefetch = 0 : i64, scratch_operands = 2 : i64, tpu.core_type = #tpu.core_type<tc>, window_params = [{transform_indices = @transform_0, window_bounds = array<i64: 8, 16, 16>}, {pipeline_mode = #tpu.pipeline_mode<synchronous>, transform_indices = @transform_1, window_bounds = array<i64: 16, 128>}, {pipeline_mode = #tpu.pipeline_mode<synchronous>, transform_indices = @transform_2, window_bounds = array<i64: 1, 128>}, {pipeline_mode = #tpu.pipeline_mode<synchronous>, transform_indices = @transform_3, window_bounds = array<i64: 128, 128>}, {pipeline_mode = #tpu.pipeline_mode<synchronous>, transform_indices = @transform_4, window_bounds = array<i64: 1, 128>}, {pipeline_mode = #tpu.pipeline_mode<synchronous>, transform_indices = @transform_5, window_bounds = array<i64: 128, 4>}, {pipeline_mode = #tpu.pipeline_mode<synchronous>, transform_indices = @transform_6, window_bounds = array<i64: 1, 1>}, {transform_indices = @transform_7, window_bounds = array<i64: 32, 128>}, {transform_indices = @transform_8, window_bounds = array<i64: 1, 128>}, {transform_indices = @transform_9, window_bounds = array<i64: 128, 32>}, {pipeline_mode = #tpu.pipeline_mode<synchronous>, transform_indices = @transform_10, window_bounds = array<i64: 1, 32>}, {pipeline_mode = #tpu.pipeline_mode<synchronous>, transform_indices = @transform_11, window_bounds = array<i64: 32, 3>}, {pipeline_mode = #tpu.pipeline_mode<synchronous>, transform_indices = @transform_12, window_bounds = array<i64: 1, 3>}, {transform_indices = @transform_13, window_bounds = array<i64: 16, 3>}]} {
    %c0_i32 = arith.constant 0 : i32
    %0 = arith.cmpi eq, %arg1, %c0_i32 : i32
    %1 = arith.extui %0 : i1 to i32
    %c0_i32_0 = arith.constant 0 : i32
    %2 = arith.cmpi ne, %1, %c0_i32_0 : i32
    scf.if %2 {
      %c0_16 = arith.constant 0 : index
      %c0_17 = arith.constant 0 : index
      %c0_18 = arith.constant 0 : index
      %19 = vector.load %arg2[%c0_16, %c0_17, %c0_18] : memref<8x16x16xf32, #tpu.memory_space<vmem>>, vector<8x16x16xf32>
      %20 = vector.shape_cast %19 : vector<8x16x16xf32> to vector<128x16xf32>
      %c0_19 = arith.constant 0 : index
      %c0_20 = arith.constant 0 : index
      %21 = vector.load %arg3[%c0_19, %c0_20] : memref<16x128xf32, #tpu.memory_space<vmem>>, vector<16x128xf32>
      %cst_21 = arith.constant dense<0.000000e+00> : vector<128x128xf32>
      %22 = tpu.matmul %20, %21, %cst_21 {dimension_numbers = #tpu.dot_dimension_numbers<[1], [0], [0], [1], [0, 0, 1, 1], [], []>} : vector<128x16xf32>, vector<16x128xf32>, vector<128x128xf32> -> vector<128x128xf32>
      %c0_22 = arith.constant 0 : index
      %c0_23 = arith.constant 0 : index
      %23 = vector.load %arg4[%c0_22, %c0_23] : memref<1x128xf32, #tpu.memory_space<vmem>>, vector<1x128xf32>
      %24 = vector.broadcast %23 : vector<1x128xf32> to vector<128x128xf32>
      %25 = arith.addf %22, %24 : vector<128x128xf32>
      %cst_24 = arith.constant 0.000000e+00 : f32
      %26 = vector.broadcast %cst_24 : f32 to vector<128x128xf32>
      %27 = arith.maximumf %25, %26 : vector<128x128xf32>
      %c0_25 = arith.constant 0 : index
      %c0_26 = arith.constant 0 : index
      %28 = vector.load %arg5[%c0_25, %c0_26] : memref<128x128xf32, #tpu.memory_space<vmem>>, vector<128x128xf32>
      %cst_27 = arith.constant dense<0.000000e+00> : vector<128x128xf32>
      %29 = tpu.matmul %27, %28, %cst_27 {dimension_numbers = #tpu.dot_dimension_numbers<[1], [0], [0], [1], [0, 0, 1, 1], [], []>} : vector<128x128xf32>, vector<128x128xf32>, vector<128x128xf32> -> vector<128x128xf32>
      %c0_28 = arith.constant 0 : index
      %c0_29 = arith.constant 0 : index
      %30 = vector.load %arg6[%c0_28, %c0_29] : memref<1x128xf32, #tpu.memory_space<vmem>>, vector<1x128xf32>
      %31 = vector.broadcast %30 : vector<1x128xf32> to vector<128x128xf32>
      %32 = arith.addf %29, %31 : vector<128x128xf32>
      %cst_30 = arith.constant 0.000000e+00 : f32
      %33 = vector.broadcast %cst_30 : f32 to vector<128x128xf32>
      %34 = arith.maximumf %32, %33 : vector<128x128xf32>
      %c0_31 = arith.constant 0 : index
      %c0_32 = arith.constant 0 : index
      %35 = vector.load %arg7[%c0_31, %c0_32] : memref<128x4xf32, #tpu.memory_space<vmem>>, vector<128x4xf32>
      %cst_33 = arith.constant dense<0.000000e+00> : vector<128x4xf32>
      %36 = tpu.matmul %34, %35, %cst_33 {dimension_numbers = #tpu.dot_dimension_numbers<[1], [0], [0], [1], [0, 0, 1, 1], [], []>} : vector<128x128xf32>, vector<128x4xf32>, vector<128x4xf32> -> vector<128x4xf32>
      %c0_34 = arith.constant 0 : index
      %c0_35 = arith.constant 0 : index
      %37 = vector.load %arg8[%c0_34, %c0_35] : memref<1x1xf32, #tpu.memory_space<vmem>>, vector<1x1xf32>
      %38 = vector.broadcast %37 : vector<1x1xf32> to vector<128x4xf32>
      %39 = arith.addf %36, %38 : vector<128x4xf32>
      %cst_36 = arith.constant 0.000000e+00 : f32
      %40 = vector.broadcast %cst_36 : f32 to vector<128x4xf32>
      %41 = arith.maximumf %39, %40 : vector<128x4xf32>
      %42 = vector.extract_strided_slice %41 {offsets = [0, 0], sizes = [16, 4], strides = [1, 1]} : vector<128x4xf32> to vector<16x4xf32>
      %43 = vector.extract_strided_slice %41 {offsets = [16, 0], sizes = [16, 4], strides = [1, 1]} : vector<128x4xf32> to vector<16x4xf32>
      %44 = vector.extract_strided_slice %41 {offsets = [32, 0], sizes = [16, 4], strides = [1, 1]} : vector<128x4xf32> to vector<16x4xf32>
      %45 = vector.extract_strided_slice %41 {offsets = [48, 0], sizes = [16, 4], strides = [1, 1]} : vector<128x4xf32> to vector<16x4xf32>
      %46 = vector.extract_strided_slice %41 {offsets = [64, 0], sizes = [16, 4], strides = [1, 1]} : vector<128x4xf32> to vector<16x4xf32>
      %47 = vector.extract_strided_slice %41 {offsets = [80, 0], sizes = [16, 4], strides = [1, 1]} : vector<128x4xf32> to vector<16x4xf32>
      %48 = vector.extract_strided_slice %41 {offsets = [96, 0], sizes = [16, 4], strides = [1, 1]} : vector<128x4xf32> to vector<16x4xf32>
      %49 = vector.extract_strided_slice %41 {offsets = [112, 0], sizes = [16, 4], strides = [1, 1]} : vector<128x4xf32> to vector<16x4xf32>
      %50 = tpu.concatenate %42, %43, %44, %45, %46, %47, %48, %49 in 1 : vector<16x4xf32>, vector<16x4xf32>, vector<16x4xf32>, vector<16x4xf32>, vector<16x4xf32>, vector<16x4xf32>, vector<16x4xf32>, vector<16x4xf32> -> vector<16x32xf32>
      %c0_37 = arith.constant 0 : index
      %c0_38 = arith.constant 0 : index
      %51 = vector.load %arg16[%c0_37, %c0_38] : memref<16x32xf32, #tpu.memory_space<vmem>>, vector<16x32xf32>
      tpu.vector_store %arg16[%c0_37, %c0_38], %50 {strides = array<i32>} : memref<16x32xf32, #tpu.memory_space<vmem>>, vector<16x32xf32>,
      %c0_39 = arith.constant 0 : index
      %c0_40 = arith.constant 0 : index
      %52 = vector.load %arg12[%c0_39, %c0_40] : memref<1x32xf32, #tpu.memory_space<vmem>>, vector<1x32xf32>
      %53 = vector.shape_cast %52 : vector<1x32xf32> to vector<1x32xf32>
      %54 = vector.broadcast %53 : vector<1x32xf32> to vector<16x32xf32>
      %c0_41 = arith.constant 0 : index
      %c0_42 = arith.constant 0 : index
      %55 = vector.load %arg17[%c0_41, %c0_42] : memref<16x32xf32, #tpu.memory_space<vmem>>, vector<16x32xf32>
      tpu.vector_store %arg17[%c0_41, %c0_42], %54 {strides = array<i32>} : memref<16x32xf32, #tpu.memory_space<vmem>>, vector<16x32xf32>,
    } else {
    }
    %c0 = arith.constant 0 : index
    %c0_1 = arith.constant 0 : index
    %3 = vector.load %arg16[%c0, %c0_1] : memref<16x32xf32, #tpu.memory_space<vmem>>, vector<16x32xf32>
    %c0_2 = arith.constant 0 : index
    %c0_3 = arith.constant 0 : index
    %4 = vector.load %arg9[%c0_2, %c0_3] : memref<32x128xf32, #tpu.memory_space<vmem>>, vector<32x128xf32>
    %cst = arith.constant dense<0.000000e+00> : vector<16x128xf32>
    %5 = tpu.matmul %3, %4, %cst {dimension_numbers = #tpu.dot_dimension_numbers<[1], [0], [0], [1], [0, 0, 1, 1], [], []>} : vector<16x32xf32>, vector<32x128xf32>, vector<16x128xf32> -> vector<16x128xf32>
    %c0_4 = arith.constant 0 : index
    %c0_5 = arith.constant 0 : index
    %6 = vector.load %arg10[%c0_4, %c0_5] : memref<1x128xf32, #tpu.memory_space<vmem>>, vector<1x128xf32>
    %7 = vector.broadcast %6 : vector<1x128xf32> to vector<16x128xf32>
    %8 = arith.addf %5, %7 : vector<16x128xf32>
    %cst_6 = arith.constant 0.000000e+00 : f32
    %9 = vector.broadcast %cst_6 : f32 to vector<16x128xf32>
    %10 = arith.maximumf %8, %9 : vector<16x128xf32>
    %c0_7 = arith.constant 0 : index
    %c0_8 = arith.constant 0 : index
    %11 = vector.load %arg17[%c0_7, %c0_8] : memref<16x32xf32, #tpu.memory_space<vmem>>, vector<16x32xf32>
    %c0_9 = arith.constant 0 : index
    %c0_10 = arith.constant 0 : index
    %12 = vector.load %arg11[%c0_9, %c0_10] : memref<128x32xf32, #tpu.memory_space<vmem>>, vector<128x32xf32>
    %cst_11 = arith.constant dense<0.000000e+00> : vector<16x32xf32>
    %13 = tpu.matmul %10, %12, %cst_11 {dimension_numbers = #tpu.dot_dimension_numbers<[1], [0], [0], [1], [0, 0, 1, 1], [], []>} : vector<16x128xf32>, vector<128x32xf32>, vector<16x32xf32> -> vector<16x32xf32>
    %14 = arith.addf %11, %13 : vector<16x32xf32>
    %c0_12 = arith.constant 0 : index
    %c0_13 = arith.constant 0 : index
    %15 = vector.load %arg17[%c0_12, %c0_13] : memref<16x32xf32, #tpu.memory_space<vmem>>, vector<16x32xf32>
    tpu.vector_store %arg17[%c0_12, %c0_13], %14 {strides = array<i32>} : memref<16x32xf32, #tpu.memory_space<vmem>>, vector<16x32xf32>,
    %c0_i32_14 = arith.constant 0 : i32
    %16 = arith.cmpi eq, %arg1, %c0_i32_14 : i32
    %17 = arith.extui %16 : i1 to i32
    %c0_i32_15 = arith.constant 0 : i32
    %18 = arith.cmpi ne, %17, %c0_i32_15 : i32
    scf.if %18 {
      %c0_16 = arith.constant 0 : index
      %c0_17 = arith.constant 0 : index
      %19 = vector.load %arg17[%c0_16, %c0_17] : memref<16x32xf32, #tpu.memory_space<vmem>>, vector<16x32xf32>
      %c0_18 = arith.constant 0 : index
      %c0_19 = arith.constant 0 : index
      %20 = vector.load %arg13[%c0_18, %c0_19] : memref<32x3xf32, #tpu.memory_space<vmem>>, vector<32x3xf32>
      %cst_20 = arith.constant dense<0.000000e+00> : vector<16x3xf32>
      %21 = tpu.matmul %19, %20, %cst_20 {dimension_numbers = #tpu.dot_dimension_numbers<[1], [0], [0], [1], [0, 0, 1, 1], [], []>} : vector<16x32xf32>, vector<32x3xf32>, vector<16x3xf32> -> vector<16x3xf32>
      %c0_21 = arith.constant 0 : index
      %c0_22 = arith.constant 0 : index
      %22 = vector.load %arg14[%c0_21, %c0_22] : memref<1x3xf32, #tpu.memory_space<vmem>>, vector<1x3xf32>
      %23 = vector.broadcast %22 : vector<1x3xf32> to vector<16x3xf32>
      %24 = arith.addf %21, %23 : vector<16x3xf32>
      %c0_23 = arith.constant 0 : index
      %c0_24 = arith.constant 0 : index
      %25 = vector.load %arg15[%c0_23, %c0_24] : memref<16x3xf32, #tpu.memory_space<vmem>>, vector<16x3xf32>
      tpu.vector_store %arg15[%c0_23, %c0_24], %24 {strides = array<i32>} : memref<16x3xf32, #tpu.memory_space<vmem>>, vector<16x3xf32>,
    } else {
    }
    return
  }
  func.func @transform_0(%arg0: i32, %arg1: i32) -> (i32, i32, i32) {
    %c0_i32 = arith.constant 0 : i32
    %c0_i32_0 = arith.constant 0 : i32
    %c0_i32_1 = arith.constant 0 : i32
    return %c0_i32, %arg0, %c0_i32_0 : i32, i32, i32
  }
  func.func @transform_1(%arg0: i32, %arg1: i32) -> (i32, i32) {
    %c0_i32 = arith.constant 0 : i32
    %c0_i32_0 = arith.constant 0 : i32
    %c0_i32_1 = arith.constant 0 : i32
    return %c0_i32, %c0_i32_0 : i32, i32
  }
  func.func @transform_2(%arg0: i32, %arg1: i32) -> (i32, i32) {
    %c0_i32 = arith.constant 0 : i32
    %c0_i32_0 = arith.constant 0 : i32
    %c0_i32_1 = arith.constant 0 : i32
    return %c0_i32, %c0_i32_0 : i32, i32
  }
  func.func @transform_3(%arg0: i32, %arg1: i32) -> (i32, i32) {
    %c0_i32 = arith.constant 0 : i32
    %c0_i32_0 = arith.constant 0 : i32
    %c0_i32_1 = arith.constant 0 : i32
    return %c0_i32, %c0_i32_0 : i32, i32
  }
  func.func @transform_4(%arg0: i32, %arg1: i32) -> (i32, i32) {
    %c0_i32 = arith.constant 0 : i32
    %c0_i32_0 = arith.constant 0 : i32
    %c0_i32_1 = arith.constant 0 : i32
    return %c0_i32, %c0_i32_0 : i32, i32
  }
  func.func @transform_5(%arg0: i32, %arg1: i32) -> (i32, i32) {
    %c0_i32 = arith.constant 0 : i32
    %c0_i32_0 = arith.constant 0 : i32
    %c0_i32_1 = arith.constant 0 : i32
    return %c0_i32, %c0_i32_0 : i32, i32
  }
  func.func @transform_6(%arg0: i32, %arg1: i32) -> (i32, i32) {
    %c0_i32 = arith.constant 0 : i32
    %c0_i32_0 = arith.constant 0 : i32
    %c0_i32_1 = arith.constant 0 : i32
    return %c0_i32, %c0_i32_0 : i32, i32
  }
  func.func @transform_7(%arg0: i32, %arg1: i32) -> (i32, i32) {
    %c0_i32 = arith.constant 0 : i32
    %c0_i32_0 = arith.constant 0 : i32
    return %c0_i32, %arg1 : i32, i32
  }
  func.func @transform_8(%arg0: i32, %arg1: i32) -> (i32, i32) {
    %c0_i32 = arith.constant 0 : i32
    %c0_i32_0 = arith.constant 0 : i32
    return %c0_i32, %arg1 : i32, i32
  }
  func.func @transform_9(%arg0: i32, %arg1: i32) -> (i32, i32) {
    %c0_i32 = arith.constant 0 : i32
    %c0_i32_0 = arith.constant 0 : i32
    return %arg1, %c0_i32 : i32, i32
  }
  func.func @transform_10(%arg0: i32, %arg1: i32) -> (i32, i32) {
    %c0_i32 = arith.constant 0 : i32
    %c0_i32_0 = arith.constant 0 : i32
    %c0_i32_1 = arith.constant 0 : i32
    return %c0_i32, %c0_i32_0 : i32, i32
  }
  func.func @transform_11(%arg0: i32, %arg1: i32) -> (i32, i32) {
    %c0_i32 = arith.constant 0 : i32
    %c0_i32_0 = arith.constant 0 : i32
    %c0_i32_1 = arith.constant 0 : i32
    return %c0_i32, %c0_i32_0 : i32, i32
  }
  func.func @transform_12(%arg0: i32, %arg1: i32) -> (i32, i32) {
    %c0_i32 = arith.constant 0 : i32
    %c0_i32_0 = arith.constant 0 : i32
    %c0_i32_1 = arith.constant 0 : i32
    return %c0_i32, %c0_i32_0 : i32, i32
  }
  func.func @transform_13(%arg0: i32, %arg1: i32) -> (i32, i32) {
    %c0_i32 = arith.constant 0 : i32
    %c0_i32_0 = arith.constant 0 : i32
    return %arg0, %c0_i32 : i32, i32
  }
}

</mosaic_0001>

<llo_original>
// kernel: tpu_custom_call.1
$region0: #{tpu_custom_call.1}
  #allocation0 [shape = 'u32[]', space=smem, size = 0x4, offset = 0x4, fixed_abs, tag = 'smem constant byte address 0x4 - core index']
  #allocation1 [shape = 'u32[144,128]{1,0:T(1,128)}', space=vmem, size = 0x12000, scoped, tag = 'internal scratch']
  #allocation2 [shape = 'f32[16,32]{1,0:T(8,128)}', space=vmem, size = 0x2000, scoped, tag = 'scratch operand']
  #allocation3 [shape = 'f32[16,32]{1,0:T(8,128)}', space=vmem, size = 0x2000, scoped, tag = 'scratch operand']
  #allocation4 [shape = 'f32[1,1]{1,0:T(1,128)S(1)}', space=vmem, size = 0x200, scoped, tag = 'scoped memory for tpu_custom_call.1']
  %s0 = inlined_call_operand.vmem [shape: f32[8,16,16], index: 0, kind: input, shape index: {}]
  %s1 = inlined_call_operand.hbm [shape: f32[16,128], index: 1, kind: input, shape index: {}]
  %s2 = inlined_call_operand.vmem [shape: f32[1,128], index: 2, kind: input, shape index: {}]
  %s3 = inlined_call_operand.vmem [shape: f32[128,128], index: 3, kind: input, shape index: {}]
  %s4 = inlined_call_operand.vmem [shape: f32[1,128], index: 4, kind: input, shape index: {}]
  %s5 = inlined_call_operand.vmem [shape: f32[128,4], index: 5, kind: input, shape index: {}]
  %s6 = inlined_call_operand.<no memory space> [shape: f32[1,1], index: 6, kind: input, shape index: {}]
  %s7 = inlined_call_operand.vmem [shape: f32[32,128], index: 7, kind: input, shape index: {}]
  %s8 = inlined_call_operand.vmem [shape: f32[1,128], index: 8, kind: input, shape index: {}]
  %s9 = inlined_call_operand.vmem [shape: f32[128,32], index: 9, kind: input, shape index: {}]
  %s10 = inlined_call_operand.vmem [shape: f32[1,32], index: 10, kind: input, shape index: {}]
  %s11 = inlined_call_operand.vmem [shape: f32[32,3], index: 11, kind: input, shape index: {}]
  %s12 = inlined_call_operand.vmem [shape: f32[1,3], index: 12, kind: input, shape index: {}]
  %s13 = inlined_call_operand.vmem [shape: f32[16,3], index: 13, kind: output, shape index: {}]
  %s14 = sld [smem:[#allocation0]]
  $region74: #{tpu_custom_call.1} parent=0
    _
  %s16 = ssub.s32 1, %s14
  %s17 = scalar_select 0, %s16, %s14
  %v18 = vstv %s6
  %19 = vst [vmem:[#allocation4] sm:$0x1] %v18
  $region1: #{tpu_custom_call.1} parent=0
    #allocation5 [shape = 'u8[8192]{0}', space=vmem, size = 0x2000, scoped, tag = 'input window, operand 1, single buffered']
    #allocation6 [shape = 's32[1]{0}', space=sflag, size = 0x4, scoped, tag = 'scoped memory for tpu_custom_call.1']
    %20 = vsyncpa [#allocation6], 0
    // Predicated region
    $region2: #{tpu_custom_call.1} parent=1 // pred_check
      _
    $region3: #{tpu_custom_call.1} parent=1 // pred_check_branch
      %22 = sbr.rel (0) target = $region5
    $region4: #{tpu_custom_call.1} parent=1 // pred_region
      _
    $region5: #{tpu_custom_call.1} parent=1 // pred_fallthru
      _
    // Predicated region
    $region6: #{tpu_custom_call.1} parent=1 // pred_check
      _
    $region7: #{tpu_custom_call.1} parent=1 // pred_check_branch
      %24 = sbr.rel (0) target = $region9
    $region8: #{tpu_custom_call.1} parent=1 // pred_region
      %s26 = ssub.s32 256, 256
      %27 = vsyncadd [#allocation6], %s26
      %s28 = sshll.u32 [#allocation5], 4
      %s29 = int_to_ptr.vmem [resolvable:$true] %s28
      %34 = dma.hbm_to_vmem [thread:$0]  %s1, 256, %s29, [#allocation6], 128, 128, 8
    $region9: #{tpu_custom_call.1} parent=1 // pred_fallthru
      _
    // Predicated region
    $region10: #{tpu_custom_call.1} parent=1 // pred_check
      _
    $region11: #{tpu_custom_call.1} parent=1 // pred_check_branch
      %36 = sbr.rel (0) target = $region13
    $region12: #{tpu_custom_call.1} parent=1 // pred_region
      _
    $region13: #{tpu_custom_call.1} parent=1 // pred_fallthru
      _
    // Predicated region
    $region14: #{tpu_custom_call.1} parent=1 // pred_check
      _
    $region15: #{tpu_custom_call.1} parent=1 // pred_check_branch
      %38 = sbr.rel (0) target = $region17
    $region16: #{tpu_custom_call.1} parent=1 // pred_region
      _
    $region17: #{tpu_custom_call.1} parent=1 // pred_fallthru
      _
    // Predicated region
    $region18: #{tpu_custom_call.1} parent=1 // pred_check
      _
    $region19: #{tpu_custom_call.1} parent=1 // pred_check_branch
      %40 = sbr.rel (0) target = $region21
    $region20: #{tpu_custom_call.1} parent=1 // pred_region
      _
    $region21: #{tpu_custom_call.1} parent=1 // pred_fallthru
      _
    // Predicated region
    $region22: #{tpu_custom_call.1} parent=1 // pred_check
      _
    $region23: #{tpu_custom_call.1} parent=1 // pred_check_branch
      %42 = sbr.rel (0) target = $region25
    $region24: #{tpu_custom_call.1} parent=1 // pred_region
      _
    $region25: #{tpu_custom_call.1} parent=1 // pred_fallthru
      _
    // Predicated region
    $region26: #{tpu_custom_call.1} parent=1 // pred_check
      _
    $region27: #{tpu_custom_call.1} parent=1 // pred_check_branch
      %44 = sbr.rel (0) target = $region29
    $region28: #{tpu_custom_call.1} parent=1 // pred_region
      _
    $region29: #{tpu_custom_call.1} parent=1 // pred_fallthru
      _
    // Predicated region
    $region30: #{tpu_custom_call.1} parent=1 // pred_check
      _
    $region31: #{tpu_custom_call.1} parent=1 // pred_check_branch
      %46 = sbr.rel (0) target = $region33
    $region32: #{tpu_custom_call.1} parent=1 // pred_region
      _
    $region33: #{tpu_custom_call.1} parent=1 // pred_fallthru
      _
    // Predicated region
    $region34: #{tpu_custom_call.1} parent=1 // pred_check
      _
    $region35: #{tpu_custom_call.1} parent=1 // pred_check_branch
      %48 = sbr.rel (0) target = $region37
    $region36: #{tpu_custom_call.1} parent=1 // pred_region
      _
    $region37: #{tpu_custom_call.1} parent=1 // pred_fallthru
      _
    // Predicated region
    $region38: #{tpu_custom_call.1} parent=1 // pred_check
      _
    $region39: #{tpu_custom_call.1} parent=1 // pred_check_branch
      %50 = sbr.rel (0) target = $region41
    $region40: #{tpu_custom_call.1} parent=1 // pred_region
      _
    $region41: #{tpu_custom_call.1} parent=1 // pred_fallthru
      _
    // Predicated region
    $region42: #{tpu_custom_call.1} parent=1 // pred_check
      _
    $region43: #{tpu_custom_call.1} parent=1 // pred_check_branch
      %52 = sbr.rel (0) target = $region45
    $region44: #{tpu_custom_call.1} parent=1 // pred_region
      _
    $region45: #{tpu_custom_call.1} parent=1 // pred_fallthru
      _
    // Predicated region
    $region46: #{tpu_custom_call.1} parent=1 // pred_check
      _
    $region47: #{tpu_custom_call.1} parent=1 // pred_check_branch
      %54 = sbr.rel (0) target = $region49
    $region48: #{tpu_custom_call.1} parent=1 // pred_region
      _
    $region49: #{tpu_custom_call.1} parent=1 // pred_fallthru
      _
    // Predicated region
    $region50: #{tpu_custom_call.1} parent=1 // pred_check
      _
    $region51: #{tpu_custom_call.1} parent=1 // pred_check_branch
      %56 = sbr.rel (0) target = $region53
    $region52: #{tpu_custom_call.1} parent=1 // pred_region
      _
    $region53: #{tpu_custom_call.1} parent=1 // pred_fallthru
      _
    // Predicated region
    $region54: #{tpu_custom_call.1} parent=1 // pred_check
      _
    $region55: #{tpu_custom_call.1} parent=1 // pred_check_branch
      %58 = sbr.rel (0) target = $region57
    $region56: #{tpu_custom_call.1} parent=1 // pred_region
      %59 = dma.done [#allocation6], 256
    $region57: #{tpu_custom_call.1} parent=1 // pred_fallthru
      _
    %p60 = scmp.eq.s32.totalorder 0, 0
    // Predicated region
    $region58: #{tpu_custom_call.1} parent=1 // pred_check
      %p61 = pneg %p60
    $region59: #{tpu_custom_call.1} parent=1 // pred_check_branch
      %63 = sbr.rel (%p61) target = $region61
    $region60: #{tpu_custom_call.1} parent=1 // pred_region
      %v64 = vld [vmem:[%s0] sm:$0xff]
      %v65 = vld [vmem:[%s0 + $0x8] sm:$0xff]
      %v66 = vld [vmem:[%s0 + $0x10] sm:$0xff]
      %v67 = vld [vmem:[%s0 + $0x18] sm:$0xff]
      %v68 = vld [vmem:[%s0 + $0x20] sm:$0xff]
      %v69 = vld [vmem:[%s0 + $0x28] sm:$0xff]
      %v70 = vld [vmem:[%s0 + $0x30] sm:$0xff]
      %v71 = vld [vmem:[%s0 + $0x38] sm:$0xff]
      %v72 = vld [vmem:[%s0 + $0x40] sm:$0xff]
      %v73 = vld [vmem:[%s0 + $0x48] sm:$0xff]
      %v74 = vld [vmem:[%s0 + $0x50] sm:$0xff]
      %v75 = vld [vmem:[%s0 + $0x58] sm:$0xff]
      %v76 = vld [vmem:[%s0 + $0x60] sm:$0xff]
      %v77 = vld [vmem:[%s0 + $0x68] sm:$0xff]
      %v78 = vld [vmem:[%s0 + $0x70] sm:$0xff]
      %v79 = vld [vmem:[%s0 + $0x78] sm:$0xff]
      %v80 = vld [vmem:[#allocation5] sm:$0xff]
      %v81 = vld [vmem:[#allocation5 + $0x8] sm:$0xff]
      %v82 = vld [vmem:[%s2] sm:$0x1]
      %v84 = vlaneseq
      %v85 = vshrl.u32 %v84, 7
      %v86 = vsub.s32 0, %v85
      %v87 = vrot.slane %v82, %v86
      %vm89 = vcmask 130048
      %v91 = vsel %vm89, %v64, 0
      %v94 = vsel %vm89, %v65, 0
      %v97 = vsel %vm89, %v66, 0
      %v100 = vsel %vm89, %v67, 0
      %v103 = vsel %vm89, %v68, 0
      %v106 = vsel %vm89, %v69, 0
      %v109 = vsel %vm89, %v70, 0
      %v112 = vsel %vm89, %v71, 0
      %v115 = vsel %vm89, %v72, 0
      %v118 = vsel %vm89, %v73, 0
      %v121 = vsel %vm89, %v74, 0
      %v124 = vsel %vm89, %v75, 0
      %v127 = vsel %vm89, %v76, 0
      %v130 = vsel %vm89, %v77, 0
      %v133 = vsel %vm89, %v78, 0
      %v136 = vsel %vm89, %v79, 0
      %138 = vmatprep.subr.mxu0 0.0
      %139 = vmatpush1.msra.mxu0 0.0
      %140 = vmatprep.subr.mxu0 0.0
      %141 = vmatpush1.msra.mxu0 0.0
      %142 = vmatprep.subr.mxu0 0.0
      %143 = vmatpush1.msra.mxu0 0.0
      %144 = vmatprep.subr.mxu0 0.0
      %145 = vmatpush1.msra.mxu0 0.0
      %146 = vmatprep.subr.mxu0 0.0
      %147 = vmatpush1.msra.mxu0 0.0
      %148 = vmatprep.subr.mxu0 0.0
      %149 = vmatpush1.msra.mxu0 0.0
      %150 = vmatprep.subr.mxu0 0.0
      %151 = vmatpush1.msra.mxu0 0.0
      %152 = vmatprep.subr.mxu0 0.0
      %153 = vmatpush1.msra.mxu0 0.0
      %154 = vmatprep.subr.mxu0 0.0
      %155 = vmatpush1.msra.mxu0 0.0
      %156 = vmatprep.subr.mxu0 0.0
      %157 = vmatpush1.msra.mxu0 0.0
      %158 = vmatprep.subr.mxu0 0.0
      %159 = vmatpush1.msra.mxu0 0.0
      %160 = vmatprep.subr.mxu0 0.0
      %161 = vmatpush1.msra.mxu0 0.0
      %162 = vmatprep.subr.mxu0 0.0
      %163 = vmatpush1.msra.mxu0 0.0
      %164 = vmatprep.subr.mxu0 0.0
      %165 = vmatpush1.msra.mxu0 0.0
      %166 = vmatprep.subr.mxu0 0.0
      %167 = vmatpush1.msra.mxu0 %v81
      %168 = vmatprep.subr.mxu0 0.0
      %169 = vmatpush1.msra.mxu0 %v80
      %170 = vmatprep.subr.mxu0 0.0
      %171 = vmatpush2.msra.mxu0 0.0
      %172 = vmatprep.subr.mxu0 0.0
      %173 = vmatpush2.msra.mxu0 0.0
      %174 = vmatprep.subr.mxu0 0.0
      %175 = vmatpush2.msra.mxu0 0.0
      %176 = vmatprep.subr.mxu0 0.0
      %177 = vmatpush2.msra.mxu0 0.0
      %178 = vmatprep.subr.mxu0 0.0
      %179 = vmatpush2.msra.mxu0 0.0
      %180 = vmatprep.subr.mxu0 0.0
      %181 = vmatpush2.msra.mxu0 0.0
      %182 = vmatprep.subr.mxu0 0.0
      %183 = vmatpush2.msra.mxu0 0.0
      %184 = vmatprep.subr.mxu0 0.0
      %185 = vmatpush2.msra.mxu0 0.0
      %186 = vmatprep.subr.mxu0 0.0
      %187 = vmatpush2.msra.mxu0 0.0
      %188 = vmatprep.subr.mxu0 0.0
      %189 = vmatpush2.msra.mxu0 0.0
      %190 = vmatprep.subr.mxu0 0.0
      %191 = vmatpush2.msra.mxu0 0.0
      %192 = vmatprep.subr.mxu0 0.0
      %193 = vmatpush2.msra.mxu0 0.0
      %194 = vmatprep.subr.mxu0 0.0
      %195 = vmatpush2.msra.mxu0 0.0
      %196 = vmatprep.subr.mxu0 0.0
      %197 = vmatpush2.msra.mxu0 0.0
      %198 = vmatprep.subr.mxu0 0.0
      %199 = vmatpush2.msra.mxu0 0.0
      %200 = vmatprep.subr.mxu0 0.0
      %201 = vmatpush2.msra.mxu0 0.0
      %202 = vmatprep.mubr.f32.mxu0 0.0
      %203 = vmatmul.mubr.f32.gmra.mxu0 %v91
      %v204 = vpop.f32.mrf.mxu0
      %v205 = vadd.f32 %v87, %v204
      %v206 = vpop.f32.mrf.mxu0
      %207 = vmatprep.mubr.f32.mxu0 0.0
      %208 = vmatmul.mubr.f32.gmra.mxu0 %v94
      %v209 = vpop.f32.mrf.mxu0
      %v210 = vadd.f32 %v87, %v209
      %v211 = vpop.f32.mrf.mxu0
      %212 = vmatprep.mubr.f32.mxu0 0.0
      %213 = vmatmul.mubr.f32.gmra.mxu0 %v97
      %v214 = vpop.f32.mrf.mxu0
      %v215 = vadd.f32 %v87, %v214
      %v216 = vpop.f32.mrf.mxu0
      %217 = vmatprep.mubr.f32.mxu0 0.0
      %218 = vmatmul.mubr.f32.gmra.mxu0 %v100
      %v219 = vpop.f32.mrf.mxu0
      %v220 = vadd.f32 %v87, %v219
      %v221 = vpop.f32.mrf.mxu0
      %222 = vmatprep.mubr.f32.mxu0 0.0
      %223 = vmatmul.mubr.f32.gmra.mxu0 %v103
      %v224 = vpop.f32.mrf.mxu0
      %v225 = vadd.f32 %v87, %v224
      %v226 = vpop.f32.mrf.mxu0
      %227 = vmatprep.mubr.f32.mxu0 0.0
      %228 = vmatmul.mubr.f32.gmra.mxu0 %v106
      %v229 = vpop.f32.mrf.mxu0
      %v230 = vadd.f32 %v87, %v229
      %v231 = vpop.f32.mrf.mxu0
      %232 = vmatprep.mubr.f32.mxu0 0.0
      %233 = vmatmul.mubr.f32.gmra.mxu0 %v109
      %v234 = vpop.f32.mrf.mxu0
      %v235 = vadd.f32 %v87, %v234
      %v236 = vpop.f32.mrf.mxu0
      %237 = vmatprep.mubr.f32.mxu0 0.0
      %238 = vmatmul.mubr.f32.gmra.mxu0 %v112
      %v239 = vpop.f32.mrf.mxu0
      %v240 = vadd.f32 %v87, %v239
      %v241 = vpop.f32.mrf.mxu0
      %242 = vmatprep.mubr.f32.mxu0 0.0
      %243 = vmatmul.mubr.f32.gmra.mxu0 %v115
      %v244 = vpop.f32.mrf.mxu0
      %v245 = vadd.f32 %v87, %v244
      %v246 = vpop.f32.mrf.mxu0
      %247 = vmatprep.mubr.f32.mxu0 0.0
      %248 = vmatmul.mubr.f32.gmra.mxu0 %v118
      %v249 = vpop.f32.mrf.mxu0
      %v250 = vadd.f32 %v87, %v249
      %v251 = vpop.f32.mrf.mxu0
      %252 = vmatprep.mubr.f32.mxu0 0.0
      %253 = vmatmul.mubr.f32.gmra.mxu0 %v121
      %v254 = vpop.f32.mrf.mxu0
      %v255 = vadd.f32 %v87, %v254
      %v256 = vpop.f32.mrf.mxu0
      %257 = vmatprep.mubr.f32.mxu0 0.0
      %258 = vmatmul.mubr.f32.gmra.mxu0 %v124
      %v259 = vpop.f32.mrf.mxu0
      %v260 = vadd.f32 %v87, %v259
      %v261 = vpop.f32.mrf.mxu0
      %262 = vmatprep.mubr.f32.mxu0 0.0
      %263 = vmatmul.mubr.f32.gmra.mxu0 %v127
      %v264 = vpop.f32.mrf.mxu0
      %v265 = vadd.f32 %v87, %v264
      %v266 = vpop.f32.mrf.mxu0
      %267 = vmatprep.mubr.f32.mxu0 0.0
      %268 = vmatmul.mubr.f32.gmra.mxu0 %v130
      %v269 = vpop.f32.mrf.mxu0
      %v270 = vadd.f32 %v87, %v269
      %v271 = vpop.f32.mrf.mxu0
      %272 = vmatprep.mubr.f32.mxu0 0.0
      %273 = vmatmul.mubr.f32.gmra.mxu0 %v133
      %v274 = vpop.f32.mrf.mxu0
      %v275 = vadd.f32 %v87, %v274
      %v276 = vpop.f32.mrf.mxu0
      %277 = vmatprep.mubr.f32.mxu0 0.0
      %278 = vmatmul.mubr.f32.gmra.mxu0 %v136
      %v279 = vpop.f32.mrf.mxu0
      %v280 = vadd.f32 %v87, %v279
      %v281 = vpop.f32.mrf.mxu0
      %282 = vdwg.mxu0
      %v283 = vmax.f32 %v205, 0.0
      %v284 = vmax.f32 %v210, 0.0
      %v285 = vmax.f32 %v215, 0.0
      %v286 = vmax.f32 %v220, 0.0
      %v287 = vmax.f32 %v225, 0.0
      %v288 = vmax.f32 %v230, 0.0
      %v289 = vmax.f32 %v235, 0.0
      %v290 = vmax.f32 %v240, 0.0
      %v291 = vmax.f32 %v245, 0.0
      %v292 = vmax.f32 %v250, 0.0
      %v293 = vmax.f32 %v255, 0.0
      %v294 = vmax.f32 %v260, 0.0
      %v295 = vmax.f32 %v265, 0.0
      %v296 = vmax.f32 %v270, 0.0
      %v297 = vmax.f32 %v275, 0.0
      %v298 = vmax.f32 %v280, 0.0
      %v299 = vld [vmem:[%s3] sm:$0xff]
      %v300 = vld [vmem:[%s3 + $0x8] sm:$0xff]
      %v301 = vld [vmem:[%s3 + $0x10] sm:$0xff]
      %v302 = vld [vmem:[%s3 + $0x18] sm:$0xff]
      %v303 = vld [vmem:[%s3 + $0x20] sm:$0xff]
      %v304 = vld [vmem:[%s3 + $0x28] sm:$0xff]
      %v305 = vld [vmem:[%s3 + $0x30] sm:$0xff]
      %v306 = vld [vmem:[%s3 + $0x38] sm:$0xff]
      %v307 = vld [vmem:[%s3 + $0x40] sm:$0xff]
      %v308 = vld [vmem:[%s3 + $0x48] sm:$0xff]
      %v309 = vld [vmem:[%s3 + $0x50] sm:$0xff]
      %v310 = vld [vmem:[%s3 + $0x58] sm:$0xff]
      %v311 = vld [vmem:[%s3 + $0x60] sm:$0xff]
      %v312 = vld [vmem:[%s3 + $0x68] sm:$0xff]
      %v313 = vld [vmem:[%s3 + $0x70] sm:$0xff]
      %v314 = vld [vmem:[%s3 + $0x78] sm:$0xff]
      %v315 = vld [vmem:[%s4] sm:$0x1]
      %v317 = vlaneseq
      %v318 = vshrl.u32 %v317, 7
      %v319 = vsub.s32 0, %v318
      %v320 = vrot.slane %v315, %v319
      %322 = vmatprep.subr.mxu0 0.0
      %323 = vmatpush1.msra.mxu0 %v314
      %324 = vmatprep.subr.mxu0 0.0
      %325 = vmatpush1.msra.mxu0 %v313
      %326 = vmatprep.subr.mxu0 0.0
      %327 = vmatpush1.msra.mxu0 %v312
      %328 = vmatprep.subr.mxu0 0.0
      %329 = vmatpush1.msra.mxu0 %v311
      %330 = vmatprep.subr.mxu0 0.0
      %331 = vmatpush1.msra.mxu0 %v310
      %332 = vmatprep.subr.mxu0 0.0
      %333 = vmatpush1.msra.mxu0 %v309
      %334 = vmatprep.subr.mxu0 0.0
      %335 = vmatpush1.msra.mxu0 %v308
      %336 = vmatprep.subr.mxu0 0.0
      %337 = vmatpush1.msra.mxu0 %v307
      %338 = vmatprep.subr.mxu0 0.0
      %339 = vmatpush1.msra.mxu0 %v306
      %340 = vmatprep.subr.mxu0 0.0
      %341 = vmatpush1.msra.mxu0 %v305
      %342 = vmatprep.subr.mxu0 0.0
      %343 = vmatpush1.msra.mxu0 %v304
      %344 = vmatprep.subr.mxu0 0.0
      %345 = vmatpush1.msra.mxu0 %v303
      %346 = vmatprep.subr.mxu0 0.0
      %347 = vmatpush1.msra.mxu0 %v302
      %348 = vmatprep.subr.mxu0 0.0
      %349 = vmatpush1.msra.mxu0 %v301
      %350 = vmatprep.subr.mxu0 0.0
      %351 = vmatpush1.msra.mxu0 %v300
      %352 = vmatprep.subr.mxu0 0.0
      %353 = vmatpush1.msra.mxu0 %v299
      %354 = vmatprep.subr.mxu0 0.0
      %355 = vmatpush2.msra.mxu0 0.0
      %356 = vmatprep.subr.mxu0 0.0
      %357 = vmatpush2.msra.mxu0 0.0
      %358 = vmatprep.subr.mxu0 0.0
      %359 = vmatpush2.msra.mxu0 0.0
      %360 = vmatprep.subr.mxu0 0.0
      %361 = vmatpush2.msra.mxu0 0.0
      %362 = vmatprep.subr.mxu0 0.0
      %363 = vmatpush2.msra.mxu0 0.0
      %364 = vmatprep.subr.mxu0 0.0
      %365 = vmatpush2.msra.mxu0 0.0
      %366 = vmatprep.subr.mxu0 0.0
      %367 = vmatpush2.msra.mxu0 0.0
      %368 = vmatprep.subr.mxu0 0.0
      %369 = vmatpush2.msra.mxu0 0.0
      %370 = vmatprep.subr.mxu0 0.0
      %371 = vmatpush2.msra.mxu0 0.0
      %372 = vmatprep.subr.mxu0 0.0
      %373 = vmatpush2.msra.mxu0 0.0
      %374 = vmatprep.subr.mxu0 0.0
      %375 = vmatpush2.msra.mxu0 0.0
      %376 = vmatprep.subr.mxu0 0.0
      %377 = vmatpush2.msra.mxu0 0.0
      %378 = vmatprep.subr.mxu0 0.0
      %379 = vmatpush2.msra.mxu0 0.0
      %380 = vmatprep.subr.mxu0 0.0
      %381 = vmatpush2.msra.mxu0 0.0
      %382 = vmatprep.subr.mxu0 0.0
      %383 = vmatpush2.msra.mxu0 0.0
      %384 = vmatprep.subr.mxu0 0.0
      %385 = vmatpush2.msra.mxu0 0.0
      %386 = vmatprep.mubr.f32.mxu0 0.0
      %387 = vmatmul.mubr.f32.gmra.mxu0 %v283
      %v388 = vpop.f32.mrf.mxu0
      %v389 = vadd.f32 %v320, %v388
      %v390 = vpop.f32.mrf.mxu0
      %391 = vmatprep.mubr.f32.mxu0 0.0
      %392 = vmatmul.mubr.f32.gmra.mxu0 %v284
      %v393 = vpop.f32.mrf.mxu0
      %v394 = vadd.f32 %v320, %v393
      %v395 = vpop.f32.mrf.mxu0
      %396 = vmatprep.mubr.f32.mxu0 0.0
      %397 = vmatmul.mubr.f32.gmra.mxu0 %v285
      %v398 = vpop.f32.mrf.mxu0
      %v399 = vadd.f32 %v320, %v398
      %v400 = vpop.f32.mrf.mxu0
      %401 = vmatprep.mubr.f32.mxu0 0.0
      %402 = vmatmul.mubr.f32.gmra.mxu0 %v286
      %v403 = vpop.f32.mrf.mxu0
      %v404 = vadd.f32 %v320, %v403
      %v405 = vpop.f32.mrf.mxu0
      %406 = vmatprep.mubr.f32.mxu0 0.0
      %407 = vmatmul.mubr.f32.gmra.mxu0 %v287
      %v408 = vpop.f32.mrf.mxu0
      %v409 = vadd.f32 %v320, %v408
      %v410 = vpop.f32.mrf.mxu0
      %411 = vmatprep.mubr.f32.mxu0 0.0
      %412 = vmatmul.mubr.f32.gmra.mxu0 %v288
      %v413 = vpop.f32.mrf.mxu0
      %v414 = vadd.f32 %v320, %v413
      %v415 = vpop.f32.mrf.mxu0
      %416 = vmatprep.mubr.f32.mxu0 0.0
      %417 = vmatmul.mubr.f32.gmra.mxu0 %v289
      %v418 = vpop.f32.mrf.mxu0
      %v419 = vadd.f32 %v320, %v418
      %v420 = vpop.f32.mrf.mxu0
      %421 = vmatprep.mubr.f32.mxu0 0.0
      %422 = vmatmul.mubr.f32.gmra.mxu0 %v290
      %v423 = vpop.f32.mrf.mxu0
      %v424 = vadd.f32 %v320, %v423
      %v425 = vpop.f32.mrf.mxu0
      %426 = vmatprep.mubr.f32.mxu0 0.0
      %427 = vmatmul.mubr.f32.gmra.mxu0 %v291
      %v428 = vpop.f32.mrf.mxu0
      %v429 = vadd.f32 %v320, %v428
      %v430 = vpop.f32.mrf.mxu0
      %431 = vmatprep.mubr.f32.mxu0 0.0
      %432 = vmatmul.mubr.f32.gmra.mxu0 %v292
      %v433 = vpop.f32.mrf.mxu0
      %v434 = vadd.f32 %v320, %v433
      %v435 = vpop.f32.mrf.mxu0
      %436 = vmatprep.mubr.f32.mxu0 0.0
      %437 = vmatmul.mubr.f32.gmra.mxu0 %v293
      %v438 = vpop.f32.mrf.mxu0
      %v439 = vadd.f32 %v320, %v438
      %v440 = vpop.f32.mrf.mxu0
      %441 = vmatprep.mubr.f32.mxu0 0.0
      %442 = vmatmul.mubr.f32.gmra.mxu0 %v294
      %v443 = vpop.f32.mrf.mxu0
      %v444 = vadd.f32 %v320, %v443
      %v445 = vpop.f32.mrf.mxu0
      %446 = vmatprep.mubr.f32.mxu0 0.0
      %447 = vmatmul.mubr.f32.gmra.mxu0 %v295
      %v448 = vpop.f32.mrf.mxu0
      %v449 = vadd.f32 %v320, %v448
      %v450 = vpop.f32.mrf.mxu0
      %451 = vmatprep.mubr.f32.mxu0 0.0
      %452 = vmatmul.mubr.f32.gmra.mxu0 %v296
      %v453 = vpop.f32.mrf.mxu0
      %v454 = vadd.f32 %v320, %v453
      %v455 = vpop.f32.mrf.mxu0
      %456 = vmatprep.mubr.f32.mxu0 0.0
      %457 = vmatmul.mubr.f32.gmra.mxu0 %v297
      %v458 = vpop.f32.mrf.mxu0
      %v459 = vadd.f32 %v320, %v458
      %v460 = vpop.f32.mrf.mxu0
      %461 = vmatprep.mubr.f32.mxu0 0.0
      %462 = vmatmul.mubr.f32.gmra.mxu0 %v298
      %v463 = vpop.f32.mrf.mxu0
      %v464 = vadd.f32 %v320, %v463
      %v465 = vpop.f32.mrf.mxu0
      %466 = vdwg.mxu0
      %v467 = vmax.f32 %v389, 0.0
      %v468 = vmax.f32 %v394, 0.0
      %v469 = vmax.f32 %v399, 0.0
      %v470 = vmax.f32 %v404, 0.0
      %v471 = vmax.f32 %v409, 0.0
      %v472 = vmax.f32 %v414, 0.0
      %v473 = vmax.f32 %v419, 0.0
      %v474 = vmax.f32 %v424, 0.0
      %v475 = vmax.f32 %v429, 0.0
      %v476 = vmax.f32 %v434, 0.0
      %v477 = vmax.f32 %v439, 0.0
      %v478 = vmax.f32 %v444, 0.0
      %v479 = vmax.f32 %v449, 0.0
      %v480 = vmax.f32 %v454, 0.0
      %v481 = vmax.f32 %v459, 0.0
      %v482 = vmax.f32 %v464, 0.0
      %v483 = vld [vmem:[%s5] sm:$0xff]
      %v484 = vld [vmem:[%s5 + $0x8] sm:$0xff]
      %v485 = vld [vmem:[%s5 + $0x10] sm:$0xff]
      %v486 = vld [vmem:[%s5 + $0x18] sm:$0xff]
      %v487 = vld [vmem:[%s5 + $0x20] sm:$0xff]
      %v488 = vld [vmem:[%s5 + $0x28] sm:$0xff]
      %v489 = vld [vmem:[%s5 + $0x30] sm:$0xff]
      %v490 = vld [vmem:[%s5 + $0x38] sm:$0xff]
      %v491 = vld [vmem:[%s5 + $0x40] sm:$0xff]
      %v492 = vld [vmem:[%s5 + $0x48] sm:$0xff]
      %v493 = vld [vmem:[%s5 + $0x50] sm:$0xff]
      %v494 = vld [vmem:[%s5 + $0x58] sm:$0xff]
      %v495 = vld [vmem:[%s5 + $0x60] sm:$0xff]
      %v496 = vld [vmem:[%s5 + $0x68] sm:$0xff]
      %v497 = vld [vmem:[%s5 + $0x70] sm:$0xff]
      %v498 = vld [vmem:[%s5 + $0x78] sm:$0xff]
      %v499 = vld [vmem:[#allocation4] sm:$0x1]
      %v501 = vlaneseq
      %v502 = vshrl.u32 %v501, 7
      %v503 = vsub.s32 0, %v502
      %v504 = vrot.slane %v499, %v503
      %505 = vset.pattern.permute.xlu0 0
      %506 = vperm.xlu0 %505, %v504
      %v507 = vpop.permute.xlu0 %506
      %509 = vmatprep.subr.mxu0 0.0
      %510 = vmatpush1.msra.mxu0 %v498
      %511 = vmatprep.subr.mxu0 0.0
      %512 = vmatpush1.msra.mxu0 %v497
      %513 = vmatprep.subr.mxu0 0.0
      %514 = vmatpush1.msra.mxu0 %v496
      %515 = vmatprep.subr.mxu0 0.0
      %516 = vmatpush1.msra.mxu0 %v495
      %517 = vmatprep.subr.mxu0 0.0
      %518 = vmatpush1.msra.mxu0 %v494
      %519 = vmatprep.subr.mxu0 0.0
      %520 = vmatpush1.msra.mxu0 %v493
      %521 = vmatprep.subr.mxu0 0.0
      %522 = vmatpush1.msra.mxu0 %v492
      %523 = vmatprep.subr.mxu0 0.0
      %524 = vmatpush1.msra.mxu0 %v491
      %525 = vmatprep.subr.mxu0 0.0
      %526 = vmatpush1.msra.mxu0 %v490
      %527 = vmatprep.subr.mxu0 0.0
      %528 = vmatpush1.msra.mxu0 %v489
      %529 = vmatprep.subr.mxu0 0.0
      %530 = vmatpush1.msra.mxu0 %v488
      %531 = vmatprep.subr.mxu0 0.0
      %532 = vmatpush1.msra.mxu0 %v487
      %533 = vmatprep.subr.mxu0 0.0
      %534 = vmatpush1.msra.mxu0 %v486
      %535 = vmatprep.subr.mxu0 0.0
      %536 = vmatpush1.msra.mxu0 %v485
      %537 = vmatprep.subr.mxu0 0.0
      %538 = vmatpush1.msra.mxu0 %v484
      %539 = vmatprep.subr.mxu0 0.0
      %540 = vmatpush1.msra.mxu0 %v483
      %541 = vmatprep.subr.mxu0 0.0
      %542 = vmatpush2.msra.mxu0 0.0
      %543 = vmatprep.subr.mxu0 0.0
      %544 = vmatpush2.msra.mxu0 0.0
      %545 = vmatprep.subr.mxu0 0.0
      %546 = vmatpush2.msra.mxu0 0.0
      %547 = vmatprep.subr.mxu0 0.0
      %548 = vmatpush2.msra.mxu0 0.0
      %549 = vmatprep.subr.mxu0 0.0
      %550 = vmatpush2.msra.mxu0 0.0
      %551 = vmatprep.subr.mxu0 0.0
      %552 = vmatpush2.msra.mxu0 0.0
      %553 = vmatprep.subr.mxu0 0.0
      %554 = vmatpush2.msra.mxu0 0.0
      %555 = vmatprep.subr.mxu0 0.0
      %556 = vmatpush2.msra.mxu0 0.0
      %557 = vmatprep.subr.mxu0 0.0
      %558 = vmatpush2.msra.mxu0 0.0
      %559 = vmatprep.subr.mxu0 0.0
      %560 = vmatpush2.msra.mxu0 0.0
      %561 = vmatprep.subr.mxu0 0.0
      %562 = vmatpush2.msra.mxu0 0.0
      %563 = vmatprep.subr.mxu0 0.0
      %564 = vmatpush2.msra.mxu0 0.0
      %565 = vmatprep.subr.mxu0 0.0
      %566 = vmatpush2.msra.mxu0 0.0
      %567 = vmatprep.subr.mxu0 0.0
      %568 = vmatpush2.msra.mxu0 0.0
      %569 = vmatprep.subr.mxu0 0.0
      %570 = vmatpush2.msra.mxu0 0.0
      %571 = vmatprep.subr.mxu0 0.0
      %572 = vmatpush2.msra.mxu0 0.0
      %573 = vmatprep.mubr.f32.mxu0 0.0
      %574 = vmatmul.mubr.f32.gmra.mxu0 %v467
      %v575 = vpop.f32.mrf.mxu0
      %v576 = vadd.f32 %v507, %v575
      %v577 = vpop.f32.mrf.mxu0
      %578 = vmatprep.mubr.f32.mxu0 0.0
      %579 = vmatmul.mubr.f32.gmra.mxu0 %v468
      %v580 = vpop.f32.mrf.mxu0
      %v581 = vadd.f32 %v507, %v580
      %v582 = vpop.f32.mrf.mxu0
      %583 = vmatprep.mubr.f32.mxu0 0.0
      %584 = vmatmul.mubr.f32.gmra.mxu0 %v469
      %v585 = vpop.f32.mrf.mxu0
      %v586 = vadd.f32 %v507, %v585
      %v587 = vpop.f32.mrf.mxu0
      %588 = vmatprep.mubr.f32.mxu0 0.0
      %589 = vmatmul.mubr.f32.gmra.mxu0 %v470
      %v590 = vpop.f32.mrf.mxu0
      %v591 = vadd.f32 %v507, %v590
      %v592 = vpop.f32.mrf.mxu0
      %593 = vmatprep.mubr.f32.mxu0 0.0
      %594 = vmatmul.mubr.f32.gmra.mxu0 %v471
      %v595 = vpop.f32.mrf.mxu0
      %v596 = vadd.f32 %v507, %v595
      %v597 = vpop.f32.mrf.mxu0
      %598 = vmatprep.mubr.f32.mxu0 0.0
      %599 = vmatmul.mubr.f32.gmra.mxu0 %v472
      %v600 = vpop.f32.mrf.mxu0
      %v601 = vadd.f32 %v507, %v600
      %v602 = vpop.f32.mrf.mxu0
      %603 = vmatprep.mubr.f32.mxu0 0.0
      %604 = vmatmul.mubr.f32.gmra.mxu0 %v473
      %v605 = vpop.f32.mrf.mxu0
      %v606 = vadd.f32 %v507, %v605
      %v607 = vpop.f32.mrf.mxu0
      %608 = vmatprep.mubr.f32.mxu0 0.0
      %609 = vmatmul.mubr.f32.gmra.mxu0 %v474
      %v610 = vpop.f32.mrf.mxu0
      %v611 = vadd.f32 %v507, %v610
      %v612 = vpop.f32.mrf.mxu0
      %613 = vmatprep.mubr.f32.mxu0 0.0
      %614 = vmatmul.mubr.f32.gmra.mxu0 %v475
      %v615 = vpop.f32.mrf.mxu0
      %v616 = vadd.f32 %v507, %v615
      %v617 = vpop.f32.mrf.mxu0
      %618 = vmatprep.mubr.f32.mxu0 0.0
      %619 = vmatmul.mubr.f32.gmra.mxu0 %v476
      %v620 = vpop.f32.mrf.mxu0
      %v621 = vadd.f32 %v507, %v620
      %v622 = vpop.f32.mrf.mxu0
      %623 = vmatprep.mubr.f32.mxu0 0.0
      %624 = vmatmul.mubr.f32.gmra.mxu0 %v477
      %v625 = vpop.f32.mrf.mxu0
      %v626 = vadd.f32 %v507, %v625
      %v627 = vpop.f32.mrf.mxu0
      %628 = vmatprep.mubr.f32.mxu0 0.0
      %629 = vmatmul.mubr.f32.gmra.mxu0 %v478
      %v630 = vpop.f32.mrf.mxu0
      %v631 = vadd.f32 %v507, %v630
      %v632 = vpop.f32.mrf.mxu0
      %633 = vmatprep.mubr.f32.mxu0 0.0
      %634 = vmatmul.mubr.f32.gmra.mxu0 %v479
      %v635 = vpop.f32.mrf.mxu0
      %v636 = vadd.f32 %v507, %v635
      %v637 = vpop.f32.mrf.mxu0
      %638 = vmatprep.mubr.f32.mxu0 0.0
      %639 = vmatmul.mubr.f32.gmra.mxu0 %v480
      %v640 = vpop.f32.mrf.mxu0
      %v641 = vadd.f32 %v507, %v640
      %v642 = vpop.f32.mrf.mxu0
      %643 = vmatprep.mubr.f32.mxu0 0.0
      %644 = vmatmul.mubr.f32.gmra.mxu0 %v481
      %v645 = vpop.f32.mrf.mxu0
      %v646 = vadd.f32 %v507, %v645
      %v647 = vpop.f32.mrf.mxu0
      %648 = vmatprep.mubr.f32.mxu0 0.0
      %649 = vmatmul.mubr.f32.gmra.mxu0 %v482
      %v650 = vpop.f32.mrf.mxu0
      %v651 = vadd.f32 %v507, %v650
      %v652 = vpop.f32.mrf.mxu0
      %653 = vdwg.mxu0
      %v654 = vmax.f32 %v576, 0.0
      %v655 = vmax.f32 %v581, 0.0
      %v656 = vmax.f32 %v586, 0.0
      %v657 = vmax.f32 %v591, 0.0
      %v658 = vmax.f32 %v596, 0.0
      %v659 = vmax.f32 %v601, 0.0
      %v660 = vmax.f32 %v606, 0.0
      %v661 = vmax.f32 %v611, 0.0
      %v662 = vmax.f32 %v616, 0.0
      %v663 = vmax.f32 %v621, 0.0
      %v664 = vmax.f32 %v626, 0.0
      %v665 = vmax.f32 %v631, 0.0
      %v666 = vmax.f32 %v636, 0.0
      %v667 = vmax.f32 %v641, 0.0
      %v668 = vmax.f32 %v646, 0.0
      %v669 = vmax.f32 %v651, 0.0
      %672 = vrot.lane.b32.xlu0 %v656, 4
      %v673 = vpop.permute.xlu0 %672
      %674 = vrot.lane.b32.xlu0 %v657, 4
      %v675 = vpop.permute.xlu0 %674
      %680 = vrot.lane.b32.xlu0 %v658, 8
      %v681 = vpop.permute.xlu0 %680
      %682 = vrot.lane.b32.xlu0 %v659, 8
      %v683 = vpop.permute.xlu0 %682
      %688 = vrot.lane.b32.xlu0 %v660, 12
      %v689 = vpop.permute.xlu0 %688
      %690 = vrot.lane.b32.xlu0 %v661, 12
      %v691 = vpop.permute.xlu0 %690
      %696 = vrot.lane.b32.xlu0 %v662, 16
      %v697 = vpop.permute.xlu0 %696
      %698 = vrot.lane.b32.xlu0 %v663, 16
      %v699 = vpop.permute.xlu0 %698
      %704 = vrot.lane.b32.xlu0 %v664, 20
      %v705 = vpop.permute.xlu0 %704
      %706 = vrot.lane.b32.xlu0 %v665, 20
      %v707 = vpop.permute.xlu0 %706
      %712 = vrot.lane.b32.xlu0 %v666, 24
      %v713 = vpop.permute.xlu0 %712
      %714 = vrot.lane.b32.xlu0 %v667, 24
      %v715 = vpop.permute.xlu0 %714
      %720 = vrot.lane.b32.xlu0 %v668, 28
      %v721 = vpop.permute.xlu0 %720
      %722 = vrot.lane.b32.xlu0 %v669, 28
      %v723 = vpop.permute.xlu0 %722
      %vm726 = vcmask 31744
      %v727 = vsel %vm726, %v654, %v673
      %v728 = vsel %vm726, %v655, %v675
      %vm729 = vcmask 64512
      %v730 = vsel %vm729, %v727, %v681
      %v731 = vsel %vm729, %v728, %v683
      %vm732 = vcmask 97280
      %v733 = vsel %vm732, %v730, %v689
      %v734 = vsel %vm732, %v731, %v691
      %v735 = vsel %vm89, %v733, %v697
      %v736 = vsel %vm89, %v734, %v699
      %vm737 = vcmask 162816
      %v738 = vsel %vm737, %v735, %v705
      %v739 = vsel %vm737, %v736, %v707
      %vm740 = vcmask 195584
      %v741 = vsel %vm740, %v738, %v713
      %v742 = vsel %vm740, %v739, %v715
      %vm743 = vcmask 228352
      %v744 = vsel %vm743, %v741, %v721
      %v745 = vsel %vm743, %v742, %v723
      %vm746 = vcmask 261120
      %747 = vst.msk [vmem:[#allocation2] sm:$0xff] %vm746, %v744
      %748 = vst.msk [vmem:[#allocation2 + $0x8] sm:$0xff] %vm746, %v745
      %v749 = vld [vmem:[%s10] sm:$0x1]
      %v751 = vlaneseq
      %v752 = vshrl.u32 %v751, 7
      %v753 = vsub.s32 0, %v752
      %v754 = vrot.slane %v749, %v753
      %756 = vst.msk [vmem:[#allocation3] sm:$0xff] %vm746, %v754
      %757 = vst.msk [vmem:[#allocation3 + $0x8] sm:$0xff] %vm746, %v754
    $region61: #{tpu_custom_call.1} parent=1 // pred_fallthru
      _
    %v758 = vld [vmem:[#allocation2] sm:$0xff]
    %v759 = vld [vmem:[#allocation2 + $0x8] sm:$0xff]
    %v760 = vld [vmem:[%s7] sm:$0xff]
    %v761 = vld [vmem:[%s7 + $0x8] sm:$0xff]
    %v762 = vld [vmem:[%s7 + $0x10] sm:$0xff]
    %v763 = vld [vmem:[%s7 + $0x18] sm:$0xff]
    %v764 = vld [vmem:[%s8] sm:$0x1]
    %v766 = vlaneseq
    %v767 = vshrl.u32 %v766, 7
    %v768 = vsub.s32 0, %v767
    %v769 = vrot.slane %v764, %v768
    %vm771 = vcmask 261120
    %v773 = vsel %vm771, %v758, 0
    %v776 = vsel %vm771, %v759, 0
    %778 = vmatprep.subr.mxu0 0.0
    %779 = vmatpush1.msra.mxu0 0.0
    %780 = vmatprep.subr.mxu0 0.0
    %781 = vmatpush1.msra.mxu0 0.0
    %782 = vmatprep.subr.mxu0 0.0
    %783 = vmatpush1.msra.mxu0 0.0
    %784 = vmatprep.subr.mxu0 0.0
    %785 = vmatpush1.msra.mxu0 0.0
    %786 = vmatprep.subr.mxu0 0.0
    %787 = vmatpush1.msra.mxu0 0.0
    %788 = vmatprep.subr.mxu0 0.0
    %789 = vmatpush1.msra.mxu0 0.0
    %790 = vmatprep.subr.mxu0 0.0
    %791 = vmatpush1.msra.mxu0 0.0
    %792 = vmatprep.subr.mxu0 0.0
    %793 = vmatpush1.msra.mxu0 0.0
    %794 = vmatprep.subr.mxu0 0.0
    %795 = vmatpush1.msra.mxu0 0.0
    %796 = vmatprep.subr.mxu0 0.0
    %797 = vmatpush1.msra.mxu0 0.0
    %798 = vmatprep.subr.mxu0 0.0
    %799 = vmatpush1.msra.mxu0 0.0
    %800 = vmatprep.subr.mxu0 0.0
    %801 = vmatpush1.msra.mxu0 0.0
    %802 = vmatprep.subr.mxu0 0.0
    %803 = vmatpush1.msra.mxu0 %v763
    %804 = vmatprep.subr.mxu0 0.0
    %805 = vmatpush1.msra.mxu0 %v762
    %806 = vmatprep.subr.mxu0 0.0
    %807 = vmatpush1.msra.mxu0 %v761
    %808 = vmatprep.subr.mxu0 0.0
    %809 = vmatpush1.msra.mxu0 %v760
    %810 = vmatprep.subr.mxu0 0.0
    %811 = vmatpush2.msra.mxu0 0.0
    %812 = vmatprep.subr.mxu0 0.0
    %813 = vmatpush2.msra.mxu0 0.0
    %814 = vmatprep.subr.mxu0 0.0
    %815 = vmatpush2.msra.mxu0 0.0
    %816 = vmatprep.subr.mxu0 0.0
    %817 = vmatpush2.msra.mxu0 0.0
    %818 = vmatprep.subr.mxu0 0.0
    %819 = vmatpush2.msra.mxu0 0.0
    %820 = vmatprep.subr.mxu0 0.0
    %821 = vmatpush2.msra.mxu0 0.0
    %822 = vmatprep.subr.mxu0 0.0
    %823 = vmatpush2.msra.mxu0 0.0
    %824 = vmatprep.subr.mxu0 0.0
    %825 = vmatpush2.msra.mxu0 0.0
    %826 = vmatprep.subr.mxu0 0.0
    %827 = vmatpush2.msra.mxu0 0.0
    %828 = vmatprep.subr.mxu0 0.0
    %829 = vmatpush2.msra.mxu0 0.0
    %830 = vmatprep.subr.mxu0 0.0
    %831 = vmatpush2.msra.mxu0 0.0
    %832 = vmatprep.subr.mxu0 0.0
    %833 = vmatpush2.msra.mxu0 0.0
    %834 = vmatprep.subr.mxu0 0.0
    %835 = vmatpush2.msra.mxu0 0.0
    %836 = vmatprep.subr.mxu0 0.0
    %837 = vmatpush2.msra.mxu0 0.0
    %838 = vmatprep.subr.mxu0 0.0
    %839 = vmatpush2.msra.mxu0 0.0
    %840 = vmatprep.subr.mxu0 0.0
    %841 = vmatpush2.msra.mxu0 0.0
    %842 = vmatprep.mubr.f32.mxu0 0.0
    %843 = vmatmul.mubr.f32.gmra.mxu0 %v773
    %v844 = vpop.f32.mrf.mxu0
    %v845 = vadd.f32 %v769, %v844
    %v846 = vpop.f32.mrf.mxu0
    %847 = vmatprep.mubr.f32.mxu0 0.0
    %848 = vmatmul.mubr.f32.gmra.mxu0 %v776
    %v849 = vpop.f32.mrf.mxu0
    %v850 = vadd.f32 %v769, %v849
    %v851 = vpop.f32.mrf.mxu0
    %852 = vdwg.mxu0
    %v853 = vmax.f32 %v845, 0.0
    %v854 = vmax.f32 %v850, 0.0
    %v855 = vld [vmem:[#allocation3] sm:$0xff]
    %v856 = vld [vmem:[#allocation3 + $0x8] sm:$0xff]
    %v857 = vld [vmem:[%s9] sm:$0xff]
    %v858 = vld [vmem:[%s9 + $0x8] sm:$0xff]
    %v859 = vld [vmem:[%s9 + $0x10] sm:$0xff]
    %v860 = vld [vmem:[%s9 + $0x18] sm:$0xff]
    %v861 = vld [vmem:[%s9 + $0x20] sm:$0xff]
    %v862 = vld [vmem:[%s9 + $0x28] sm:$0xff]
    %v863 = vld [vmem:[%s9 + $0x30] sm:$0xff]
    %v864 = vld [vmem:[%s9 + $0x38] sm:$0xff]
    %v865 = vld [vmem:[%s9 + $0x40] sm:$0xff]
    %v866 = vld [vmem:[%s9 + $0x48] sm:$0xff]
    %v867 = vld [vmem:[%s9 + $0x50] sm:$0xff]
    %v868 = vld [vmem:[%s9 + $0x58] sm:$0xff]
    %v869 = vld [vmem:[%s9 + $0x60] sm:$0xff]
    %v870 = vld [vmem:[%s9 + $0x68] sm:$0xff]
    %v871 = vld [vmem:[%s9 + $0x70] sm:$0xff]
    %v872 = vld [vmem:[%s9 + $0x78] sm:$0xff]
    %873 = vmatprep.subr.mxu0 0.0
    %874 = vmatpush1.msra.mxu0 %v872
    %875 = vmatprep.subr.mxu0 0.0
    %876 = vmatpush1.msra.mxu0 %v871
    %877 = vmatprep.subr.mxu0 0.0
    %878 = vmatpush1.msra.mxu0 %v870
    %879 = vmatprep.subr.mxu0 0.0
    %880 = vmatpush1.msra.mxu0 %v869
    %881 = vmatprep.subr.mxu0 0.0
    %882 = vmatpush1.msra.mxu0 %v868
    %883 = vmatprep.subr.mxu0 0.0
    %884 = vmatpush1.msra.mxu0 %v867
    %885 = vmatprep.subr.mxu0 0.0
    %886 = vmatpush1.msra.mxu0 %v866
    %887 = vmatprep.subr.mxu0 0.0
    %888 = vmatpush1.msra.mxu0 %v865
    %889 = vmatprep.subr.mxu0 0.0
    %890 = vmatpush1.msra.mxu0 %v864
    %891 = vmatprep.subr.mxu0 0.0
    %892 = vmatpush1.msra.mxu0 %v863
    %893 = vmatprep.subr.mxu0 0.0
    %894 = vmatpush1.msra.mxu0 %v862
    %895 = vmatprep.subr.mxu0 0.0
    %896 = vmatpush1.msra.mxu0 %v861
    %897 = vmatprep.subr.mxu0 0.0
    %898 = vmatpush1.msra.mxu0 %v860
    %899 = vmatprep.subr.mxu0 0.0
    %900 = vmatpush1.msra.mxu0 %v859
    %901 = vmatprep.subr.mxu0 0.0
    %902 = vmatpush1.msra.mxu0 %v858
    %903 = vmatprep.subr.mxu0 0.0
    %904 = vmatpush1.msra.mxu0 %v857
    %905 = vmatprep.subr.mxu0 0.0
    %906 = vmatpush2.msra.mxu0 0.0
    %907 = vmatprep.subr.mxu0 0.0
    %908 = vmatpush2.msra.mxu0 0.0
    %909 = vmatprep.subr.mxu0 0.0
    %910 = vmatpush2.msra.mxu0 0.0
    %911 = vmatprep.subr.mxu0 0.0
    %912 = vmatpush2.msra.mxu0 0.0
    %913 = vmatprep.subr.mxu0 0.0
    %914 = vmatpush2.msra.mxu0 0.0
    %915 = vmatprep.subr.mxu0 0.0
    %916 = vmatpush2.msra.mxu0 0.0
    %917 = vmatprep.subr.mxu0 0.0
    %918 = vmatpush2.msra.mxu0 0.0
    %919 = vmatprep.subr.mxu0 0.0
    %920 = vmatpush2.msra.mxu0 0.0
    %921 = vmatprep.subr.mxu0 0.0
    %922 = vmatpush2.msra.mxu0 0.0
    %923 = vmatprep.subr.mxu0 0.0
    %924 = vmatpush2.msra.mxu0 0.0
    %925 = vmatprep.subr.mxu0 0.0
    %926 = vmatpush2.msra.mxu0 0.0
    %927 = vmatprep.subr.mxu0 0.0
    %928 = vmatpush2.msra.mxu0 0.0
    %929 = vmatprep.subr.mxu0 0.0
    %930 = vmatpush2.msra.mxu0 0.0
    %931 = vmatprep.subr.mxu0 0.0
    %932 = vmatpush2.msra.mxu0 0.0
    %933 = vmatprep.subr.mxu0 0.0
    %934 = vmatpush2.msra.mxu0 0.0
    %935 = vmatprep.subr.mxu0 0.0
    %936 = vmatpush2.msra.mxu0 0.0
    %937 = vmatprep.mubr.f32.mxu0 0.0
    %938 = vmatmul.mubr.f32.gmra.mxu0 %v853
    %v939 = vpop.f32.mrf.mxu0
    %v940 = vadd.f32 0.0, %v939
    %v941 = vpop.f32.mrf.mxu0
    %942 = vmatprep.mubr.f32.mxu0 0.0
    %943 = vmatmul.mubr.f32.gmra.mxu0 %v854
    %v944 = vpop.f32.mrf.mxu0
    %v945 = vadd.f32 0.0, %v944
    %v946 = vpop.f32.mrf.mxu0
    %947 = vdwg.mxu0
    %v948 = vadd.f32 %v855, %v940
    %v949 = vadd.f32 %v856, %v945
    %950 = vst.msk [vmem:[#allocation3] sm:$0xff] %vm771, %v948
    %951 = vst.msk [vmem:[#allocation3 + $0x8] sm:$0xff] %vm771, %v949
    // Predicated region
    $region62: #{tpu_custom_call.1} parent=1 // pred_check
      %p952 = pneg %p60
    $region63: #{tpu_custom_call.1} parent=1 // pred_check_branch
      %954 = sbr.rel (%p952) target = $region65
    $region64: #{tpu_custom_call.1} parent=1 // pred_region
      %v955 = vld [vmem:[#allocation3] sm:$0xff]
      %v956 = vld [vmem:[#allocation3 + $0x8] sm:$0xff]
      %v957 = vld [vmem:[%s11] sm:$0xff]
      %v958 = vld [vmem:[%s11 + $0x8] sm:$0xff]
      %v959 = vld [vmem:[%s11 + $0x10] sm:$0xff]
      %v960 = vld [vmem:[%s11 + $0x18] sm:$0xff]
      %v961 = vld [vmem:[%s12] sm:$0x1]
      %v963 = vlaneseq
      %v964 = vshrl.u32 %v963, 7
      %v965 = vsub.s32 0, %v964
      %v966 = vrot.slane %v961, %v965
      %v969 = vsel %vm771, %v955, 0
      %v972 = vsel %vm771, %v956, 0
      %974 = vmatprep.subr.mxu0 0.0
      %975 = vmatpush1.msra.mxu0 0.0
      %976 = vmatprep.subr.mxu0 0.0
      %977 = vmatpush1.msra.mxu0 0.0
      %978 = vmatprep.subr.mxu0 0.0
      %979 = vmatpush1.msra.mxu0 0.0
      %980 = vmatprep.subr.mxu0 0.0
      %981 = vmatpush1.msra.mxu0 0.0
      %982 = vmatprep.subr.mxu0 0.0
      %983 = vmatpush1.msra.mxu0 0.0
      %984 = vmatprep.subr.mxu0 0.0
      %985 = vmatpush1.msra.mxu0 0.0
      %986 = vmatprep.subr.mxu0 0.0
      %987 = vmatpush1.msra.mxu0 0.0
      %988 = vmatprep.subr.mxu0 0.0
      %989 = vmatpush1.msra.mxu0 0.0
      %990 = vmatprep.subr.mxu0 0.0
      %991 = vmatpush1.msra.mxu0 0.0
      %992 = vmatprep.subr.mxu0 0.0
      %993 = vmatpush1.msra.mxu0 0.0
      %994 = vmatprep.subr.mxu0 0.0
      %995 = vmatpush1.msra.mxu0 0.0
      %996 = vmatprep.subr.mxu0 0.0
      %997 = vmatpush1.msra.mxu0 0.0
      %998 = vmatprep.subr.mxu0 0.0
      %999 = vmatpush1.msra.mxu0 %v960
      %1000 = vmatprep.subr.mxu0 0.0
      %1001 = vmatpush1.msra.mxu0 %v959
      %1002 = vmatprep.subr.mxu0 0.0
      %1003 = vmatpush1.msra.mxu0 %v958
      %1004 = vmatprep.subr.mxu0 0.0
      %1005 = vmatpush1.msra.mxu0 %v957
      %1006 = vmatprep.subr.mxu0 0.0
      %1007 = vmatpush2.msra.mxu0 0.0
      %1008 = vmatprep.subr.mxu0 0.0
      %1009 = vmatpush2.msra.mxu0 0.0
      %1010 = vmatprep.subr.mxu0 0.0
      %1011 = vmatpush2.msra.mxu0 0.0
      %1012 = vmatprep.subr.mxu0 0.0
      %1013 = vmatpush2.msra.mxu0 0.0
      %1014 = vmatprep.subr.mxu0 0.0
      %1015 = vmatpush2.msra.mxu0 0.0
      %1016 = vmatprep.subr.mxu0 0.0
      %1017 = vmatpush2.msra.mxu0 0.0
      %1018 = vmatprep.subr.mxu0 0.0
      %1019 = vmatpush2.msra.mxu0 0.0
      %1020 = vmatprep.subr.mxu0 0.0
      %1021 = vmatpush2.msra.mxu0 0.0
      %1022 = vmatprep.subr.mxu0 0.0
      %1023 = vmatpush2.msra.mxu0 0.0
      %1024 = vmatprep.subr.mxu0 0.0
      %1025 = vmatpush2.msra.mxu0 0.0
      %1026 = vmatprep.subr.mxu0 0.0
      %1027 = vmatpush2.msra.mxu0 0.0
      %1028 = vmatprep.subr.mxu0 0.0
      %1029 = vmatpush2.msra.mxu0 0.0
      %1030 = vmatprep.subr.mxu0 0.0
      %1031 = vmatpush2.msra.mxu0 0.0
      %1032 = vmatprep.subr.mxu0 0.0
      %1033 = vmatpush2.msra.mxu0 0.0
      %1034 = vmatprep.subr.mxu0 0.0
      %1035 = vmatpush2.msra.mxu0 0.0
      %1036 = vmatprep.subr.mxu0 0.0
      %1037 = vmatpush2.msra.mxu0 0.0
      %1038 = vmatprep.mubr.f32.mxu0 0.0
      %1039 = vmatmul.mubr.f32.gmra.mxu0 %v969
      %v1040 = vpop.f32.mrf.mxu0
      %v1041 = vadd.f32 %v966, %v1040
      %v1042 = vpop.f32.mrf.mxu0
      %1043 = vmatprep.mubr.f32.mxu0 0.0
      %1044 = vmatmul.mubr.f32.gmra.mxu0 %v972
      %v1045 = vpop.f32.mrf.mxu0
      %v1046 = vadd.f32 %v966, %v1045
      %v1047 = vpop.f32.mrf.mxu0
      %1048 = vdwg.mxu0
      %vm1049 = vcmask 23552
      %1050 = vst.msk [vmem:[%s13] sm:$0xff] %vm1049, %v1041
      %1051 = vst.msk [vmem:[%s13 + $0x8] sm:$0xff] %vm1049, %v1046
    $region65: #{tpu_custom_call.1} parent=1 // pred_fallthru
      _
    // Predicated region
    $region66: #{tpu_custom_call.1} parent=1 // pred_check
      _
    $region67: #{tpu_custom_call.1} parent=1 // pred_check_branch
      %1053 = sbr.rel (0) target = $region69
    $region68: #{tpu_custom_call.1} parent=1 // pred_region
      _
    $region69: #{tpu_custom_call.1} parent=1 // pred_fallthru
      _
    // Predicated region
    $region70: #{tpu_custom_call.1} parent=1 // pred_check
      _
    $region71: #{tpu_custom_call.1} parent=1 // pred_check_branch
      %1055 = sbr.rel (0) target = $region73
    $region72: #{tpu_custom_call.1} parent=1 // pred_region
      _
    $region73: #{tpu_custom_call.1} parent=1 // pred_fallthru
      _
    %1056 = vsyncpa [#allocation6], 1

</llo_original>
